<compile_context>
chip_gen: v5e
topology: v5e:2x2
jax: 0.10.0
libtpu: 0.0.40
codegen_flags: <defaults>
</compile_context>

<pallas_src>
import math
import jax
import jax.numpy as jnp
from jax.experimental import pallas as pl
from jax.experimental.pallas import tpu as pltpu

# architecture constants fixed by the PyTorch module
H1, H2, H3, H4 = 64, 256, 256, 784
# 128-lane-aligned start offsets of each bias inside the packed (1, 1664) row
B_OFF = (0, 128, 384, 640, 1536)
B_PACKED_WIDTH = 1664


def _round_up(x, m):
    return -(-x // m) * m


# ----------------------------------------------------------------------------
# Kernel: fused fc1->relu->fc2->relu->fc3->relu->fc4->relu->fc5->sigmoid
# ----------------------------------------------------------------------------
def _make_kernel(z_size, code_dim, transpose_out=False):
    r1 = z_size          # rows of w1 inside the packed w123 slab
    r2 = r1 + H1
    r3 = r2 + H2

    def kernel(x_ref, w123_ref, w4_ref, w5_ref, bias_ref, o_ref):
        x = x_ref[...].astype(jnp.bfloat16)

        w1 = w123_ref[0:r1, :]       # (z, 256)  -- real data in cols [:, :64]
        w2 = w123_ref[r1:r2, :]      # (64, 256)
        w3 = w123_ref[r2:r3, :]      # (256, 256)

        b1 = bias_ref[:, B_OFF[0]:B_OFF[0] + H1]
        b2 = bias_ref[:, B_OFF[1]:B_OFF[1] + H2]
        b3 = bias_ref[:, B_OFF[2]:B_OFF[2] + H3]
        b4 = bias_ref[:, B_OFF[3]:B_OFF[3] + H4]
        b5 = bias_ref[:, B_OFF[4]:B_OFF[4] + code_dim]

        # fc1: w1 is zero lane-padded to 256; keep only the real 64 columns
        h = jnp.dot(x, w1, preferred_element_type=jnp.float32)[:, :H1] + b1
        h = jnp.maximum(h, 0.0).astype(jnp.bfloat16)

        h = jnp.dot(h, w2, preferred_element_type=jnp.float32) + b2
        h = jnp.maximum(h, 0.0).astype(jnp.bfloat16)

        h = jnp.dot(h, w3, preferred_element_type=jnp.float32) + b3
        h = jnp.maximum(h, 0.0).astype(jnp.bfloat16)

        h = jnp.dot(h, w4_ref[...], preferred_element_type=jnp.float32) + b4
        h = jnp.maximum(h, 0.0).astype(jnp.bfloat16)

        z = jnp.dot(h, w5_ref[...], preferred_element_type=jnp.float32) + b5
        # exp + reciprocal both on the EUP slot (approx rel-err ~1e-4 << 1e-3)
        sig = pl.reciprocal(1.0 + jnp.exp(-z), approx=True)

        if transpose_out:
            o_ref[...] = sig.T            # (code_dim, tile_b) lane-dense store
        else:
            o_ref[...] = sig              # (tile_b, code_dim)

    return kernel


# ----------------------------------------------------------------------------
# One-time parameter repack: bf16 weights, w1/w2/w3 slab, single bias row
# ----------------------------------------------------------------------------
def pack_params(params):
    w1, w2, w3, w4, w5 = (params[f"w{i}"] for i in range(1, 6))
    b1, b2, b3, b4, b5 = (params[f"b{i}"] for i in range(1, 6))

    w1p = jnp.pad(w1, ((0, 0), (0, H2 - w1.shape[1])))            # (z, 256)
    w123 = jnp.concatenate([w1p, w2, w3], axis=0).astype(jnp.bfloat16)

    def seg(b, width):
        return jnp.pad(b, ((0, 0), (0, width - b.shape[1])))

    bias = jnp.concatenate(
        [seg(b1, 128), seg(b2, 256), seg(b3, 256), seg(b4, 896),
         seg(b5, B_PACKED_WIDTH - B_OFF[4])],
        axis=1).astype(jnp.float32)                                # (1, 1664)

    return {
        "w123": w123,                      # (z + 64 + 256, 256) bf16
        "w4": w4.astype(jnp.bfloat16),     # (256, 784) bf16
        "w5": w5.astype(jnp.bfloat16),     # (784, code_dim) bf16
        "bias": bias,                      # (1, 1664) f32
        "z_size": int(w1.shape[0]),
        "code_dim": int(w5.shape[1]),
    }


# ----------------------------------------------------------------------------
# Batch-tile heuristic
#   * cap 256: fills v6e/v7x 256-row MXU on fc4, halves step count vs 128
#   * >= 2 tiles whenever B > 8 so ("parallel",) can use both v7x TCs
#   * multiple of 8 sublanes
# ----------------------------------------------------------------------------
def _choose_tile_b(B):
    if B <= 8:
        return 8
    half = _round_up(-(-B // 2), 8)
    return max(8, min(256, half))


# ----------------------------------------------------------------------------
# Wrapper
#   lane_dense_output=False -> returns (B, code_dim)  (default; best for tiny B)
#   lane_dense_output=True  -> returns (code_dim, B)  (dense HBM writeback for
#                              throughput regimes; consumer accepts transpose)
# ----------------------------------------------------------------------------
def generator_cifar10_in_code_forward(samples, packed, *, lane_dense_output=False):
    B, z_size = samples.shape
    assert z_size == packed["z_size"]
    code_dim = packed["code_dim"]

    tile_b = _choose_tile_b(B)
    num_tiles = pl.cdiv(B, tile_b)

    # lane-dense path needs the batch (lane) block dim to be 128-aligned or the
    # full array; otherwise fall back to the row-major layout.
    if lane_dense_output and not (tile_b == B or tile_b % 128 == 0):
        lane_dense_output = False

    const = lambda i: (0, 0)   # weights/biases: same block every step -> VMEM-resident

    if lane_dense_output:
        out_shape = jax.ShapeDtypeStruct((code_dim, B), jnp.float32)
        out_spec = pl.BlockSpec((code_dim, tile_b), lambda i: (0, i))
    else:
        out_shape = jax.ShapeDtypeStruct((B, code_dim), jnp.float32)
        out_spec = pl.BlockSpec((tile_b, code_dim), lambda i: (i, 0))

    return pl.pallas_call(
        _make_kernel(z_size, code_dim, transpose_out=lane_dense_output),
        out_shape=out_shape,
        grid=(num_tiles,),
        in_specs=[
            pl.BlockSpec((tile_b, z_size), lambda i: (i, 0)),
            pl.BlockSpec(packed["w123"].shape, const),
            pl.BlockSpec(packed["w4"].shape, const),
            pl.BlockSpec(packed["w5"].shape, const),
            pl.BlockSpec(packed["bias"].shape, const),
        ],
        out_specs=out_spec,
        compiler_params=pltpu.CompilerParams(
            dimension_semantics=("parallel",)),
    )(samples, packed["w123"], packed["w4"], packed["w5"], packed["bias"])


# ----------------------------------------------------------------------------
# Deterministic parameter init (mirrors nn.Linear default U(-1/sqrt(fan_in), +))
# ----------------------------------------------------------------------------
def init_params(key, z_size, code_dim):
    dims = [z_size, H1, H2, H3, H4, code_dim]
    params = {}
    keys = jax.random.split(key, 2 * (len(dims) - 1))
    for i in range(len(dims) - 1):
        fan_in, fan_out = dims[i], dims[i + 1]
        bound = 1.0 / math.sqrt(fan_in)
        params[f"w{i + 1}"] = jax.random.uniform(
            keys[2 * i], (fan_in, fan_out), minval=-bound, maxval=bound,
            dtype=jnp.float32)
        params[f"b{i + 1}"] = jax.random.uniform(
            keys[2 * i + 1], (1, fan_out), minval=-bound, maxval=bound,
            dtype=jnp.float32)
    return params


# Pure-JAX reference with the same bf16-weight / f32-accumulate quantization.
def reference_forward(samples, params):
    def dense(h, w, b):
        return jnp.dot(h.astype(jnp.bfloat16), w.astype(jnp.bfloat16),
                       preferred_element_type=jnp.float32) + b
    h = jnp.maximum(dense(samples, params["w1"], params["b1"]), 0.0)
    h = jnp.maximum(dense(h, params["w2"], params["b2"]), 0.0)
    h = jnp.maximum(dense(h, params["w3"], params["b3"]), 0.0)
    h = jnp.maximum(dense(h, params["w4"], params["b4"]), 0.0)
    z = dense(h, params["w5"], params["b5"])
    return 1.0 / (1.0 + jnp.exp(-z))


if __name__ == "__main__":
    z_size = 32
    code_dim = 16

    key = jax.random.PRNGKey(0)
    k_params, k_in1, k_in2, k_in3 = jax.random.split(key, 4)

    params = init_params(k_params, z_size, code_dim)
    packed = pack_params(params)

    # 1) tiny batch (weight-DMA bound regime), default row-major output
    x8 = jax.random.normal(k_in1, (8, z_size), dtype=jnp.float32)
    out8 = jax.block_until_ready(generator_cifar10_in_code_forward(x8, packed))
    ref8 = reference_forward(x8, params)
    assert out8.shape == (8, code_dim), out8.shape
    assert jnp.allclose(out8, ref8, atol=2e-3, rtol=2e-3), "mismatch (B=8)"

    # 2) ragged batch: exercises Pallas boundary masking (no host pad/slice)
    x20 = jax.random.normal(k_in2, (20, z_size), dtype=jnp.float32)
    out20 = jax.block_until_ready(generator_cifar10_in_code_forward(x20, packed))
    assert out20.shape == (20, code_dim), out20.shape
    assert jnp.allclose(out20, reference_forward(x20, params),
                        atol=2e-3, rtol=2e-3), "mismatch (B=20 ragged)"

    # 3) throughput regime: tile_b=256, 2 grid steps, lane-dense (transposed) output
    x512 = jax.random.normal(k_in3, (512, z_size), dtype=jnp.float32)
    outT = jax.block_until_ready(
        generator_cifar10_in_code_forward(x512, packed, lane_dense_output=True))
    assert outT.shape == (code_dim, 512), outT.shape
    assert jnp.allclose(outT, reference_forward(x512, params).T,
                        atol=2e-3, rtol=2e-3), "mismatch (B=512 lane-dense)"

    print("KERNEL_OK")
</pallas_src>

<mosaic_0001>
module attributes {stable_mosaic.version = 11 : i64} {
  func.func @kernel(%arg0: i32, %arg1: memref<8x32xf32, #tpu.memory_space<vmem>>, %arg2: memref<352x256xbf16, #tpu.memory_space<vmem>>, %arg3: memref<256x784xbf16, #tpu.memory_space<vmem>>, %arg4: memref<784x16xbf16, #tpu.memory_space<vmem>>, %arg5: memref<1x1664xf32, #tpu.memory_space<vmem>>, %arg6: memref<8x16xf32, #tpu.memory_space<vmem>>) attributes {dimension_semantics = [#tpu.dimension_semantics<parallel>], iteration_bounds = array<i64: 1>, scalar_prefetch = 0 : i64, scratch_operands = 0 : i64, tpu.core_type = #tpu.core_type<tc>, window_params = [{transform_indices = @transform_0, window_bounds = array<i64: 8, 32>}, {pipeline_mode = #tpu.pipeline_mode<synchronous>, transform_indices = @transform_1, window_bounds = array<i64: 352, 256>}, {pipeline_mode = #tpu.pipeline_mode<synchronous>, transform_indices = @transform_2, window_bounds = array<i64: 256, 784>}, {pipeline_mode = #tpu.pipeline_mode<synchronous>, transform_indices = @transform_3, window_bounds = array<i64: 784, 16>}, {pipeline_mode = #tpu.pipeline_mode<synchronous>, transform_indices = @transform_4, window_bounds = array<i64: 1, 1664>}, {transform_indices = @transform_5, window_bounds = array<i64: 8, 16>}]} {
    %c0 = arith.constant 0 : index
    %c0_0 = arith.constant 0 : index
    %0 = vector.load %arg1[%c0, %c0_0] : memref<8x32xf32, #tpu.memory_space<vmem>>, vector<8x32xf32>
    %1 = arith.truncf %0 : vector<8x32xf32> to vector<8x32xbf16>
    %c0_1 = arith.constant 0 : index
    %c0_2 = arith.constant 0 : index
    %2 = vector.load %arg2[%c0_1, %c0_2] : memref<352x256xbf16, #tpu.memory_space<vmem>>, vector<32x256xbf16>
    %c32 = arith.constant 32 : index
    %c0_3 = arith.constant 0 : index
    %3 = vector.load %arg2[%c32, %c0_3] : memref<352x256xbf16, #tpu.memory_space<vmem>>, vector<64x256xbf16>
    %c96 = arith.constant 96 : index
    %c0_4 = arith.constant 0 : index
    %4 = vector.load %arg2[%c96, %c0_4] : memref<352x256xbf16, #tpu.memory_space<vmem>>, vector<256x256xbf16>
    %c0_5 = arith.constant 0 : index
    %c0_6 = arith.constant 0 : index
    %5 = vector.load %arg5[%c0_5, %c0_6] : memref<1x1664xf32, #tpu.memory_space<vmem>>, vector<1x64xf32>
    %c0_7 = arith.constant 0 : index
    %c128 = arith.constant 128 : index
    %6 = vector.load %arg5[%c0_7, %c128] : memref<1x1664xf32, #tpu.memory_space<vmem>>, vector<1x256xf32>
    %c0_8 = arith.constant 0 : index
    %c384 = arith.constant 384 : index
    %7 = vector.load %arg5[%c0_8, %c384] : memref<1x1664xf32, #tpu.memory_space<vmem>>, vector<1x256xf32>
    %c0_9 = arith.constant 0 : index
    %c640 = arith.constant 640 : index
    %8 = vector.load %arg5[%c0_9, %c640] : memref<1x1664xf32, #tpu.memory_space<vmem>>, vector<1x784xf32>
    %c0_10 = arith.constant 0 : index
    %c1536 = arith.constant 1536 : index
    %9 = vector.load %arg5[%c0_10, %c1536] : memref<1x1664xf32, #tpu.memory_space<vmem>>, vector<1x16xf32>
    %cst = arith.constant dense<0.000000e+00> : vector<8x256xf32>
    %10 = tpu.matmul %1, %2, %cst {dimension_numbers = #tpu.dot_dimension_numbers<[1], [0], [0], [1], [0, 0, 1, 1], [], []>} : vector<8x32xbf16>, vector<32x256xbf16>, vector<8x256xf32> -> vector<8x256xf32>
    %11 = vector.extract_strided_slice %10 {offsets = [0, 0], sizes = [8, 64], strides = [1, 1]} : vector<8x256xf32> to vector<8x64xf32>
    %12 = vector.broadcast %5 : vector<1x64xf32> to vector<8x64xf32>
    %13 = arith.addf %11, %12 : vector<8x64xf32>
    %cst_11 = arith.constant 0.000000e+00 : f32
    %14 = vector.broadcast %cst_11 : f32 to vector<8x64xf32>
    %15 = arith.maximumf %13, %14 : vector<8x64xf32>
    %16 = arith.truncf %15 : vector<8x64xf32> to vector<8x64xbf16>
    %cst_12 = arith.constant dense<0.000000e+00> : vector<8x256xf32>
    %17 = tpu.matmul %16, %3, %cst_12 {dimension_numbers = #tpu.dot_dimension_numbers<[1], [0], [0], [1], [0, 0, 1, 1], [], []>} : vector<8x64xbf16>, vector<64x256xbf16>, vector<8x256xf32> -> vector<8x256xf32>
    %18 = vector.broadcast %6 : vector<1x256xf32> to vector<8x256xf32>
    %19 = arith.addf %17, %18 : vector<8x256xf32>
    %cst_13 = arith.constant 0.000000e+00 : f32
    %20 = vector.broadcast %cst_13 : f32 to vector<8x256xf32>
    %21 = arith.maximumf %19, %20 : vector<8x256xf32>
    %22 = arith.truncf %21 : vector<8x256xf32> to vector<8x256xbf16>
    %cst_14 = arith.constant dense<0.000000e+00> : vector<8x256xf32>
    %23 = tpu.matmul %22, %4, %cst_14 {dimension_numbers = #tpu.dot_dimension_numbers<[1], [0], [0], [1], [0, 0, 1, 1], [], []>} : vector<8x256xbf16>, vector<256x256xbf16>, vector<8x256xf32> -> vector<8x256xf32>
    %24 = vector.broadcast %7 : vector<1x256xf32> to vector<8x256xf32>
    %25 = arith.addf %23, %24 : vector<8x256xf32>
    %cst_15 = arith.constant 0.000000e+00 : f32
    %26 = vector.broadcast %cst_15 : f32 to vector<8x256xf32>
    %27 = arith.maximumf %25, %26 : vector<8x256xf32>
    %28 = arith.truncf %27 : vector<8x256xf32> to vector<8x256xbf16>
    %c0_16 = arith.constant 0 : index
    %c0_17 = arith.constant 0 : index
    %29 = vector.load %arg3[%c0_16, %c0_17] : memref<256x784xbf16, #tpu.memory_space<vmem>>, vector<256x784xbf16>
    %cst_18 = arith.constant dense<0.000000e+00> : vector<8x784xf32>
    %30 = tpu.matmul %28, %29, %cst_18 {dimension_numbers = #tpu.dot_dimension_numbers<[1], [0], [0], [1], [0, 0, 1, 1], [], []>} : vector<8x256xbf16>, vector<256x784xbf16>, vector<8x784xf32> -> vector<8x784xf32>
    %31 = vector.broadcast %8 : vector<1x784xf32> to vector<8x784xf32>
    %32 = arith.addf %30, %31 : vector<8x784xf32>
    %cst_19 = arith.constant 0.000000e+00 : f32
    %33 = vector.broadcast %cst_19 : f32 to vector<8x784xf32>
    %34 = arith.maximumf %32, %33 : vector<8x784xf32>
    %35 = arith.truncf %34 : vector<8x784xf32> to vector<8x784xbf16>
    %c0_20 = arith.constant 0 : index
    %c0_21 = arith.constant 0 : index
    %36 = vector.load %arg4[%c0_20, %c0_21] : memref<784x16xbf16, #tpu.memory_space<vmem>>, vector<784x16xbf16>
    %cst_22 = arith.constant dense<0.000000e+00> : vector<8x16xf32>
    %37 = tpu.matmul %35, %36, %cst_22 {dimension_numbers = #tpu.dot_dimension_numbers<[1], [0], [0], [1], [0, 0, 1, 1], [], []>} : vector<8x784xbf16>, vector<784x16xbf16>, vector<8x16xf32> -> vector<8x16xf32>
    %38 = vector.broadcast %9 : vector<1x16xf32> to vector<8x16xf32>
    %39 = arith.addf %37, %38 : vector<8x16xf32>
    %cst_23 = arith.constant 0.000000e+00 : f32
    %40 = vector.broadcast %cst_23 : f32 to vector<8x16xf32>
    %41 = arith.subf %40, %39 : vector<8x16xf32>
    %42 = math.exp %41 : vector<8x16xf32>
    %cst_24 = arith.constant 1.000000e+00 : f32
    %43 = vector.broadcast %cst_24 : f32 to vector<8x16xf32>
    %44 = arith.addf %43, %42 : vector<8x16xf32>
    %45 = tpu.reciprocal %44 {approx = true} : vector<8x16xf32> -> vector<8x16xf32>
    %c0_25 = arith.constant 0 : index
    %c0_26 = arith.constant 0 : index
    %46 = vector.load %arg6[%c0_25, %c0_26] : memref<8x16xf32, #tpu.memory_space<vmem>>, vector<8x16xf32>
    tpu.vector_store %arg6[%c0_25, %c0_26], %45 {strides = array<i32>} : memref<8x16xf32, #tpu.memory_space<vmem>>, vector<8x16xf32>,
    return
  }
  func.func @transform_0(%arg0: i32) -> (i32, i32) {
    %c0_i32 = arith.constant 0 : i32
    %c0_i32_0 = arith.constant 0 : i32
    return %arg0, %c0_i32 : i32, i32
  }
  func.func @transform_1(%arg0: i32) -> (i32, i32) {
    %c0_i32 = arith.constant 0 : i32
    %c0_i32_0 = arith.constant 0 : i32
    %c0_i32_1 = arith.constant 0 : i32
    return %c0_i32, %c0_i32_0 : i32, i32
  }
  func.func @transform_2(%arg0: i32) -> (i32, i32) {
    %c0_i32 = arith.constant 0 : i32
    %c0_i32_0 = arith.constant 0 : i32
    %c0_i32_1 = arith.constant 0 : i32
    return %c0_i32, %c0_i32_0 : i32, i32
  }
  func.func @transform_3(%arg0: i32) -> (i32, i32) {
    %c0_i32 = arith.constant 0 : i32
    %c0_i32_0 = arith.constant 0 : i32
    %c0_i32_1 = arith.constant 0 : i32
    return %c0_i32, %c0_i32_0 : i32, i32
  }
  func.func @transform_4(%arg0: i32) -> (i32, i32) {
    %c0_i32 = arith.constant 0 : i32
    %c0_i32_0 = arith.constant 0 : i32
    %c0_i32_1 = arith.constant 0 : i32
    return %c0_i32, %c0_i32_0 : i32, i32
  }
  func.func @transform_5(%arg0: i32) -> (i32, i32) {
    %c0_i32 = arith.constant 0 : i32
    %c0_i32_0 = arith.constant 0 : i32
    return %arg0, %c0_i32 : i32, i32
  }
}

</mosaic_0001>

<llo_original>
// kernel: tpu_custom_call.1
$region0: #{tpu_custom_call.1}
  #allocation0 [shape = 'u32[]', space=smem, size = 0x4, offset = 0x4, fixed_abs, tag = 'smem constant byte address 0x4 - core index']
  #allocation1 [shape = 'u32[72,128]{1,0:T(1,128)}', space=vmem, size = 0x9000, scoped, tag = 'internal scratch']
  %s0 = inlined_call_operand.vmem [shape: f32[8,32], index: 0, kind: input, shape index: {}]
  %s1 = inlined_call_operand.vmem [shape: bf16[352,256], index: 1, kind: input, shape index: {}]
  %s2 = inlined_call_operand.vmem [shape: bf16[256,784], index: 2, kind: input, shape index: {}]
  %s3 = inlined_call_operand.vmem [shape: bf16[784,16], index: 3, kind: input, shape index: {}]
  %s4 = inlined_call_operand.vmem [shape: f32[1,1664], index: 4, kind: input, shape index: {}]
  %s5 = inlined_call_operand.hbm [shape: f32[8,16], index: 5, kind: output, shape index: {}]
  %s6 = sld [smem:[#allocation0]]
  $region30: #{tpu_custom_call.1} parent=0
    _
  %s8 = ssub.s32 1, %s6
  %s9 = scalar_select 0, %s8, %s6
  $region1: #{tpu_custom_call.1} parent=0
    #allocation2 [shape = 'u8[4096]{0}', space=vmem, size = 0x1000, scoped, tag = 'output window, operand 0, single buffered']
    #allocation3 [shape = 's32[1]{0}', space=sflag, size = 0x4, scoped, tag = 'scoped memory for tpu_custom_call.1']
    %10 = vsyncpa [#allocation3], 0
    // Predicated region
    $region2: #{tpu_custom_call.1} parent=1 // pred_check
      _
    $region3: #{tpu_custom_call.1} parent=1 // pred_check_branch
      %12 = sbr.rel (0) target = $region5
    $region4: #{tpu_custom_call.1} parent=1 // pred_region
      _
    $region5: #{tpu_custom_call.1} parent=1 // pred_fallthru
      _
    // Predicated region
    $region6: #{tpu_custom_call.1} parent=1 // pred_check
      _
    $region7: #{tpu_custom_call.1} parent=1 // pred_check_branch
      %14 = sbr.rel (0) target = $region9
    $region8: #{tpu_custom_call.1} parent=1 // pred_region
      _
    $region9: #{tpu_custom_call.1} parent=1 // pred_fallthru
      _
    // Predicated region
    $region10: #{tpu_custom_call.1} parent=1 // pred_check
      _
    $region11: #{tpu_custom_call.1} parent=1 // pred_check_branch
      %16 = sbr.rel (0) target = $region13
    $region12: #{tpu_custom_call.1} parent=1 // pred_region
      _
    $region13: #{tpu_custom_call.1} parent=1 // pred_fallthru
      _
    // Predicated region
    $region14: #{tpu_custom_call.1} parent=1 // pred_check
      _
    $region15: #{tpu_custom_call.1} parent=1 // pred_check_branch
      %18 = sbr.rel (0) target = $region17
    $region16: #{tpu_custom_call.1} parent=1 // pred_region
      _
    $region17: #{tpu_custom_call.1} parent=1 // pred_fallthru
      _
    // Predicated region
    $region18: #{tpu_custom_call.1} parent=1 // pred_check
      _
    $region19: #{tpu_custom_call.1} parent=1 // pred_check_branch
      %20 = sbr.rel (0) target = $region21
    $region20: #{tpu_custom_call.1} parent=1 // pred_region
      _
    $region21: #{tpu_custom_call.1} parent=1 // pred_fallthru
      _
    %v22 = vld [vmem:[%s0] sm:$0xff]
    %v23 = vpack.c.bf16 %v22, %v22
    %v24 = vld [vmem:[%s1] sm:$0xff]
    %v25 = vld [vmem:[%s1 + $0x8] sm:$0xff]
    %v26 = vld [vmem:[%s1 + $0x10] sm:$0xff]
    %v27 = vld [vmem:[%s1 + $0x18] sm:$0xff]
    %v28 = vld [vmem:[%s1 + $0x20] sm:$0xff]
    %v29 = vld [vmem:[%s1 + $0x28] sm:$0xff]
    %v30 = vld [vmem:[%s1 + $0x30] sm:$0xff]
    %v31 = vld [vmem:[%s1 + $0x38] sm:$0xff]
    %v32 = vld [vmem:[%s1 + $0x40] sm:$0xff]
    %v33 = vld [vmem:[%s1 + $0x48] sm:$0xff]
    %v34 = vld [vmem:[%s1 + $0x50] sm:$0xff]
    %v35 = vld [vmem:[%s1 + $0x58] sm:$0xff]
    %v36 = vld [vmem:[%s1 + $0x60] sm:$0xff]
    %v37 = vld [vmem:[%s1 + $0x68] sm:$0xff]
    %v38 = vld [vmem:[%s1 + $0x70] sm:$0xff]
    %v39 = vld [vmem:[%s1 + $0x78] sm:$0xff]
    %v40 = vld [vmem:[%s1 + $0x80] sm:$0xff]
    %v41 = vld [vmem:[%s1 + $0x88] sm:$0xff]
    %v42 = vld [vmem:[%s1 + $0x90] sm:$0xff]
    %v43 = vld [vmem:[%s1 + $0x98] sm:$0xff]
    %v44 = vld [vmem:[%s1 + $0xa0] sm:$0xff]
    %v45 = vld [vmem:[%s1 + $0xa8] sm:$0xff]
    %v46 = vld [vmem:[%s1 + $0xb0] sm:$0xff]
    %v47 = vld [vmem:[%s1 + $0xb8] sm:$0xff]
    %v48 = vld [vmem:[%s1 + $0xc0] sm:$0xff]
    %v49 = vld [vmem:[%s1 + $0xc8] sm:$0xff]
    %v50 = vld [vmem:[%s1 + $0xd0] sm:$0xff]
    %v51 = vld [vmem:[%s1 + $0xd8] sm:$0xff]
    %v52 = vld [vmem:[%s1 + $0xe0] sm:$0xff]
    %v53 = vld [vmem:[%s1 + $0xe8] sm:$0xff]
    %v54 = vld [vmem:[%s1 + $0xf0] sm:$0xff]
    %v55 = vld [vmem:[%s1 + $0xf8] sm:$0xff]
    %v56 = vld [vmem:[%s1 + $0x100] sm:$0xff]
    %v57 = vld [vmem:[%s1 + $0x108] sm:$0xff]
    %v58 = vld [vmem:[%s1 + $0x110] sm:$0xff]
    %v59 = vld [vmem:[%s1 + $0x118] sm:$0xff]
    %v60 = vld [vmem:[%s1 + $0x120] sm:$0xff]
    %v61 = vld [vmem:[%s1 + $0x128] sm:$0xff]
    %v62 = vld [vmem:[%s1 + $0x130] sm:$0xff]
    %v63 = vld [vmem:[%s1 + $0x138] sm:$0xff]
    %v64 = vld [vmem:[%s1 + $0x140] sm:$0xff]
    %v65 = vld [vmem:[%s1 + $0x148] sm:$0xff]
    %v66 = vld [vmem:[%s1 + $0x150] sm:$0xff]
    %v67 = vld [vmem:[%s1 + $0x158] sm:$0xff]
    %v68 = vld [vmem:[%s4] sm:$0x1]
    %v69 = vld [vmem:[%s4 + $0x1] sm:$0x3]
    %v70 = vld [vmem:[%s4 + $0x3] sm:$0x3]
    %v71 = vld [vmem:[%s4 + $0x5] sm:$0x7f]
    %v72 = vld [vmem:[%s4 + $0xc] sm:$0x1]
    %v77 = vunpack.c.l.b16 %v24
    %v78 = vunpack.c.l.b16 %v25
    %v79 = vunpack.c.l.b16 %v26
    %v80 = vunpack.c.l.b16 %v27
    %v81 = vpack.c.b16 %v78, %v77
    %v82 = vpack.c.b16 %v80, %v79
    %vm85 = vcmask 261120
    %v87 = vsel %vm85, %v23, 0
    %89 = vmatpush.bf16.msra.mxu0 0
    %90 = vmatpush.bf16.msra.mxu0 0
    %91 = vmatpush.bf16.msra.mxu0 0
    %92 = vmatpush.bf16.msra.mxu0 0
    %93 = vmatpush.bf16.msra.mxu0 0
    %94 = vmatpush.bf16.msra.mxu0 0
    %95 = vmatpush.bf16.msra.mxu0 %v82
    %96 = vmatpush.bf16.msra.mxu0 %v81
    %97 = vmatmul.bf16.gmra.mxu0 %v87
    %v98 = vpop.f32.mrf.mxu0
    %v99 = vadd.f32 0.0, %v98
    %v100 = vpop.f32.mrf.mxu0
    %101 = vdwg.mxu0
    %v103 = vperm.slane %v68, 0
    %v105 = vadd.f32 %v99, %v103
    %v106 = vmax.f32 %v105, 0.0
    %v107 = vpack.c.bf16 %v106, %v106
    %v109 = vperm.slane %v69, 0
    %v110 = vperm.slane %v69, 1
    %v121 = vunpack.c.l.b16 %v28
    %v122 = vunpack.c.h.b16 %v28
    %v123 = vunpack.c.l.b16 %v29
    %v124 = vunpack.c.h.b16 %v29
    %v125 = vunpack.c.l.b16 %v30
    %v126 = vunpack.c.h.b16 %v30
    %v127 = vunpack.c.l.b16 %v31
    %v128 = vunpack.c.h.b16 %v31
    %v129 = vunpack.c.l.b16 %v32
    %v130 = vunpack.c.h.b16 %v32
    %v131 = vunpack.c.l.b16 %v33
    %v132 = vunpack.c.h.b16 %v33
    %v133 = vunpack.c.l.b16 %v34
    %v134 = vunpack.c.h.b16 %v34
    %v135 = vunpack.c.l.b16 %v35
    %v136 = vunpack.c.h.b16 %v35
    %v137 = vpack.c.b16 %v123, %v121
    %v138 = vpack.c.b16 %v124, %v122
    %v139 = vpack.c.b16 %v127, %v125
    %v140 = vpack.c.b16 %v128, %v126
    %v141 = vpack.c.b16 %v131, %v129
    %v142 = vpack.c.b16 %v132, %v130
    %v143 = vpack.c.b16 %v135, %v133
    %v144 = vpack.c.b16 %v136, %v134
    %vm153 = vcmask 523264
    %v155 = vsel %vm153, %v107, 0
    %157 = vmatpush.bf16.msra.mxu0 0
    %158 = vmatpush.bf16.msra.mxu0 0
    %159 = vmatpush.bf16.msra.mxu0 0
    %160 = vmatpush.bf16.msra.mxu0 0
    %161 = vmatpush.bf16.msra.mxu0 %v143
    %162 = vmatpush.bf16.msra.mxu0 %v141
    %163 = vmatpush.bf16.msra.mxu0 %v139
    %164 = vmatpush.bf16.msra.mxu0 %v137
    %165 = vmatmul.bf16.gmra.mxu0 %v155
    %v166 = vpop.f32.mrf.mxu0
    %v167 = vadd.f32 %v109, %v166
    %v168 = vpop.f32.mrf.mxu0
    %169 = vdwg.mxu0
    %170 = vmatpush.bf16.msra.mxu0 0
    %171 = vmatpush.bf16.msra.mxu0 0
    %172 = vmatpush.bf16.msra.mxu0 0
    %173 = vmatpush.bf16.msra.mxu0 0
    %174 = vmatpush.bf16.msra.mxu0 %v144
    %175 = vmatpush.bf16.msra.mxu0 %v142
    %176 = vmatpush.bf16.msra.mxu0 %v140
    %177 = vmatpush.bf16.msra.mxu0 %v138
    %178 = vmatmul.bf16.gmra.mxu0 %v155
    %v179 = vpop.f32.mrf.mxu0
    %v180 = vadd.f32 %v110, %v179
    %v181 = vpop.f32.mrf.mxu0
    %182 = vdwg.mxu0
    %v183 = vmax.f32 %v167, 0.0
    %v184 = vmax.f32 %v180, 0.0
    %v185 = vpack.c.bf16 %v183, %v183
    %v186 = vpack.c.bf16 %v184, %v184
    %v188 = vperm.slane %v70, 0
    %v189 = vperm.slane %v70, 1
    %v224 = vunpack.c.l.b16 %v36
    %v225 = vunpack.c.h.b16 %v36
    %v226 = vunpack.c.l.b16 %v37
    %v227 = vunpack.c.h.b16 %v37
    %v228 = vunpack.c.l.b16 %v38
    %v229 = vunpack.c.h.b16 %v38
    %v230 = vunpack.c.l.b16 %v39
    %v231 = vunpack.c.h.b16 %v39
    %v232 = vunpack.c.l.b16 %v40
    %v233 = vunpack.c.h.b16 %v40
    %v234 = vunpack.c.l.b16 %v41
    %v235 = vunpack.c.h.b16 %v41
    %v236 = vunpack.c.l.b16 %v42
    %v237 = vunpack.c.h.b16 %v42
    %v238 = vunpack.c.l.b16 %v43
    %v239 = vunpack.c.h.b16 %v43
    %v240 = vunpack.c.l.b16 %v44
    %v241 = vunpack.c.h.b16 %v44
    %v242 = vunpack.c.l.b16 %v45
    %v243 = vunpack.c.h.b16 %v45
    %v244 = vunpack.c.l.b16 %v46
    %v245 = vunpack.c.h.b16 %v46
    %v246 = vunpack.c.l.b16 %v47
    %v247 = vunpack.c.h.b16 %v47
    %v248 = vunpack.c.l.b16 %v48
    %v249 = vunpack.c.h.b16 %v48
    %v250 = vunpack.c.l.b16 %v49
    %v251 = vunpack.c.h.b16 %v49
    %v252 = vunpack.c.l.b16 %v50
    %v253 = vunpack.c.h.b16 %v50
    %v254 = vunpack.c.l.b16 %v51
    %v255 = vunpack.c.h.b16 %v51
    %v256 = vunpack.c.l.b16 %v52
    %v257 = vunpack.c.h.b16 %v52
    %v258 = vunpack.c.l.b16 %v53
    %v259 = vunpack.c.h.b16 %v53
    %v260 = vunpack.c.l.b16 %v54
    %v261 = vunpack.c.h.b16 %v54
    %v262 = vunpack.c.l.b16 %v55
    %v263 = vunpack.c.h.b16 %v55
    %v264 = vunpack.c.l.b16 %v56
    %v265 = vunpack.c.h.b16 %v56
    %v266 = vunpack.c.l.b16 %v57
    %v267 = vunpack.c.h.b16 %v57
    %v268 = vunpack.c.l.b16 %v58
    %v269 = vunpack.c.h.b16 %v58
    %v270 = vunpack.c.l.b16 %v59
    %v271 = vunpack.c.h.b16 %v59
    %v272 = vunpack.c.l.b16 %v60
    %v273 = vunpack.c.h.b16 %v60
    %v274 = vunpack.c.l.b16 %v61
    %v275 = vunpack.c.h.b16 %v61
    %v276 = vunpack.c.l.b16 %v62
    %v277 = vunpack.c.h.b16 %v62
    %v278 = vunpack.c.l.b16 %v63
    %v279 = vunpack.c.h.b16 %v63
    %v280 = vunpack.c.l.b16 %v64
    %v281 = vunpack.c.h.b16 %v64
    %v282 = vunpack.c.l.b16 %v65
    %v283 = vunpack.c.h.b16 %v65
    %v284 = vunpack.c.l.b16 %v66
    %v285 = vunpack.c.h.b16 %v66
    %v286 = vunpack.c.l.b16 %v67
    %v287 = vunpack.c.h.b16 %v67
    %v288 = vpack.c.b16 %v226, %v224
    %v289 = vpack.c.b16 %v227, %v225
    %v290 = vpack.c.b16 %v230, %v228
    %v291 = vpack.c.b16 %v231, %v229
    %v292 = vpack.c.b16 %v234, %v232
    %v293 = vpack.c.b16 %v235, %v233
    %v294 = vpack.c.b16 %v238, %v236
    %v295 = vpack.c.b16 %v239, %v237
    %v296 = vpack.c.b16 %v242, %v240
    %v297 = vpack.c.b16 %v243, %v241
    %v298 = vpack.c.b16 %v246, %v244
    %v299 = vpack.c.b16 %v247, %v245
    %v300 = vpack.c.b16 %v250, %v248
    %v301 = vpack.c.b16 %v251, %v249
    %v302 = vpack.c.b16 %v254, %v252
    %v303 = vpack.c.b16 %v255, %v253
    %v304 = vpack.c.b16 %v258, %v256
    %v305 = vpack.c.b16 %v259, %v257
    %v306 = vpack.c.b16 %v262, %v260
    %v307 = vpack.c.b16 %v263, %v261
    %v308 = vpack.c.b16 %v266, %v264
    %v309 = vpack.c.b16 %v267, %v265
    %v310 = vpack.c.b16 %v270, %v268
    %v311 = vpack.c.b16 %v271, %v269
    %v312 = vpack.c.b16 %v274, %v272
    %v313 = vpack.c.b16 %v275, %v273
    %v314 = vpack.c.b16 %v278, %v276
    %v315 = vpack.c.b16 %v279, %v277
    %v316 = vpack.c.b16 %v282, %v280
    %v317 = vpack.c.b16 %v283, %v281
    %v318 = vpack.c.b16 %v286, %v284
    %v319 = vpack.c.b16 %v287, %v285
    %352 = vmatpush.bf16.msra.mxu0 %v302
    %353 = vmatpush.bf16.msra.mxu0 %v300
    %354 = vmatpush.bf16.msra.mxu0 %v298
    %355 = vmatpush.bf16.msra.mxu0 %v296
    %356 = vmatpush.bf16.msra.mxu0 %v294
    %357 = vmatpush.bf16.msra.mxu0 %v292
    %358 = vmatpush.bf16.msra.mxu0 %v290
    %359 = vmatpush.bf16.msra.mxu0 %v288
    %360 = vmatmul.bf16.gmra.mxu0 %v185
    %v361 = vpop.f32.mrf.mxu0
    %v362 = vadd.f32 %v188, %v361
    %v363 = vpop.f32.mrf.mxu0
    %364 = vdwg.mxu0
    %365 = vmatpush.bf16.msra.mxu0 %v318
    %366 = vmatpush.bf16.msra.mxu0 %v316
    %367 = vmatpush.bf16.msra.mxu0 %v314
    %368 = vmatpush.bf16.msra.mxu0 %v312
    %369 = vmatpush.bf16.msra.mxu0 %v310
    %370 = vmatpush.bf16.msra.mxu0 %v308
    %371 = vmatpush.bf16.msra.mxu0 %v306
    %372 = vmatpush.bf16.msra.mxu0 %v304
    %373 = vmatmul.bf16.gmra.mxu0 %v186
    %v374 = vpop.f32.mrf.mxu0
    %v375 = vadd.f32 %v362, %v374
    %v376 = vpop.f32.mrf.mxu0
    %377 = vdwg.mxu0
    %378 = vmatpush.bf16.msra.mxu0 %v303
    %379 = vmatpush.bf16.msra.mxu0 %v301
    %380 = vmatpush.bf16.msra.mxu0 %v299
    %381 = vmatpush.bf16.msra.mxu0 %v297
    %382 = vmatpush.bf16.msra.mxu0 %v295
    %383 = vmatpush.bf16.msra.mxu0 %v293
    %384 = vmatpush.bf16.msra.mxu0 %v291
    %385 = vmatpush.bf16.msra.mxu0 %v289
    %386 = vmatmul.bf16.gmra.mxu0 %v185
    %v387 = vpop.f32.mrf.mxu0
    %v388 = vadd.f32 %v189, %v387
    %v389 = vpop.f32.mrf.mxu0
    %390 = vdwg.mxu0
    %391 = vmatpush.bf16.msra.mxu0 %v319
    %392 = vmatpush.bf16.msra.mxu0 %v317
    %393 = vmatpush.bf16.msra.mxu0 %v315
    %394 = vmatpush.bf16.msra.mxu0 %v313
    %395 = vmatpush.bf16.msra.mxu0 %v311
    %396 = vmatpush.bf16.msra.mxu0 %v309
    %397 = vmatpush.bf16.msra.mxu0 %v307
    %398 = vmatpush.bf16.msra.mxu0 %v305
    %399 = vmatmul.bf16.gmra.mxu0 %v186
    %v400 = vpop.f32.mrf.mxu0
    %v401 = vadd.f32 %v388, %v400
    %v402 = vpop.f32.mrf.mxu0
    %403 = vdwg.mxu0
    %v404 = vmax.f32 %v375, 0.0
    %v405 = vmax.f32 %v401, 0.0
    %v406 = vpack.c.bf16 %v404, %v404
    %v407 = vpack.c.bf16 %v405, %v405
    %v408 = vld [vmem:[%s2] sm:$0xff]
    %v409 = vld [vmem:[%s2 + $0x8] sm:$0xff]
    %v410 = vld [vmem:[%s2 + $0x10] sm:$0xff]
    %v411 = vld [vmem:[%s2 + $0x18] sm:$0xf]
    %v412 = vld [vmem:[%s2 + $0x1c] sm:$0xff]
    %v413 = vld [vmem:[%s2 + $0x24] sm:$0xff]
    %v414 = vld [vmem:[%s2 + $0x2c] sm:$0xff]
    %v415 = vld [vmem:[%s2 + $0x34] sm:$0xf]
    %v416 = vld [vmem:[%s2 + $0x38] sm:$0xff]
    %v417 = vld [vmem:[%s2 + $0x40] sm:$0xff]
    %v418 = vld [vmem:[%s2 + $0x48] sm:$0xff]
    %v419 = vld [vmem:[%s2 + $0x50] sm:$0xf]
    %v420 = vld [vmem:[%s2 + $0x54] sm:$0xff]
    %v421 = vld [vmem:[%s2 + $0x5c] sm:$0xff]
    %v422 = vld [vmem:[%s2 + $0x64] sm:$0xff]
    %v423 = vld [vmem:[%s2 + $0x6c] sm:$0xf]
    %v424 = vld [vmem:[%s2 + $0x70] sm:$0xff]
    %v425 = vld [vmem:[%s2 + $0x78] sm:$0xff]
    %v426 = vld [vmem:[%s2 + $0x80] sm:$0xff]
    %v427 = vld [vmem:[%s2 + $0x88] sm:$0xf]
    %v428 = vld [vmem:[%s2 + $0x8c] sm:$0xff]
    %v429 = vld [vmem:[%s2 + $0x94] sm:$0xff]
    %v430 = vld [vmem:[%s2 + $0x9c] sm:$0xff]
    %v431 = vld [vmem:[%s2 + $0xa4] sm:$0xf]
    %v432 = vld [vmem:[%s2 + $0xa8] sm:$0xff]
    %v433 = vld [vmem:[%s2 + $0xb0] sm:$0xff]
    %v434 = vld [vmem:[%s2 + $0xb8] sm:$0xff]
    %v435 = vld [vmem:[%s2 + $0xc0] sm:$0xf]
    %v436 = vld [vmem:[%s2 + $0xc4] sm:$0xff]
    %v437 = vld [vmem:[%s2 + $0xcc] sm:$0xff]
    %v438 = vld [vmem:[%s2 + $0xd4] sm:$0xff]
    %v439 = vld [vmem:[%s2 + $0xdc] sm:$0xf]
    %v440 = vld [vmem:[%s2 + $0xe0] sm:$0xff]
    %v441 = vld [vmem:[%s2 + $0xe8] sm:$0xff]
    %v442 = vld [vmem:[%s2 + $0xf0] sm:$0xff]
    %v443 = vld [vmem:[%s2 + $0xf8] sm:$0xf]
    %v444 = vld [vmem:[%s2 + $0xfc] sm:$0xff]
    %v445 = vld [vmem:[%s2 + $0x104] sm:$0xff]
    %v446 = vld [vmem:[%s2 + $0x10c] sm:$0xff]
    %v447 = vld [vmem:[%s2 + $0x114] sm:$0xf]
    %v448 = vld [vmem:[%s2 + $0x118] sm:$0xff]
    %v449 = vld [vmem:[%s2 + $0x120] sm:$0xff]
    %v450 = vld [vmem:[%s2 + $0x128] sm:$0xff]
    %v451 = vld [vmem:[%s2 + $0x130] sm:$0xf]
    %v452 = vld [vmem:[%s2 + $0x134] sm:$0xff]
    %v453 = vld [vmem:[%s2 + $0x13c] sm:$0xff]
    %v454 = vld [vmem:[%s2 + $0x144] sm:$0xff]
    %v455 = vld [vmem:[%s2 + $0x14c] sm:$0xf]
    %v456 = vld [vmem:[%s2 + $0x150] sm:$0xff]
    %v457 = vld [vmem:[%s2 + $0x158] sm:$0xff]
    %v458 = vld [vmem:[%s2 + $0x160] sm:$0xff]
    %v459 = vld [vmem:[%s2 + $0x168] sm:$0xf]
    %v460 = vld [vmem:[%s2 + $0x16c] sm:$0xff]
    %v461 = vld [vmem:[%s2 + $0x174] sm:$0xff]
    %v462 = vld [vmem:[%s2 + $0x17c] sm:$0xff]
    %v463 = vld [vmem:[%s2 + $0x184] sm:$0xf]
    %v464 = vld [vmem:[%s2 + $0x188] sm:$0xff]
    %v465 = vld [vmem:[%s2 + $0x190] sm:$0xff]
    %v466 = vld [vmem:[%s2 + $0x198] sm:$0xff]
    %v467 = vld [vmem:[%s2 + $0x1a0] sm:$0xf]
    %v468 = vld [vmem:[%s2 + $0x1a4] sm:$0xff]
    %v469 = vld [vmem:[%s2 + $0x1ac] sm:$0xff]
    %v470 = vld [vmem:[%s2 + $0x1b4] sm:$0xff]
    %v471 = vld [vmem:[%s2 + $0x1bc] sm:$0xf]
    %v472 = vld [vmem:[%s2 + $0x1c0] sm:$0xff]
    %v473 = vld [vmem:[%s2 + $0x1c8] sm:$0xff]
    %v474 = vld [vmem:[%s2 + $0x1d0] sm:$0xff]
    %v475 = vld [vmem:[%s2 + $0x1d8] sm:$0xf]
    %v476 = vld [vmem:[%s2 + $0x1dc] sm:$0xff]
    %v477 = vld [vmem:[%s2 + $0x1e4] sm:$0xff]
    %v478 = vld [vmem:[%s2 + $0x1ec] sm:$0xff]
    %v479 = vld [vmem:[%s2 + $0x1f4] sm:$0xf]
    %v480 = vld [vmem:[%s2 + $0x1f8] sm:$0xff]
    %v481 = vld [vmem:[%s2 + $0x200] sm:$0xff]
    %v482 = vld [vmem:[%s2 + $0x208] sm:$0xff]
    %v483 = vld [vmem:[%s2 + $0x210] sm:$0xf]
    %v484 = vld [vmem:[%s2 + $0x214] sm:$0xff]
    %v485 = vld [vmem:[%s2 + $0x21c] sm:$0xff]
    %v486 = vld [vmem:[%s2 + $0x224] sm:$0xff]
    %v487 = vld [vmem:[%s2 + $0x22c] sm:$0xf]
    %v488 = vld [vmem:[%s2 + $0x230] sm:$0xff]
    %v489 = vld [vmem:[%s2 + $0x238] sm:$0xff]
    %v490 = vld [vmem:[%s2 + $0x240] sm:$0xff]
    %v491 = vld [vmem:[%s2 + $0x248] sm:$0xf]
    %v492 = vld [vmem:[%s2 + $0x24c] sm:$0xff]
    %v493 = vld [vmem:[%s2 + $0x254] sm:$0xff]
    %v494 = vld [vmem:[%s2 + $0x25c] sm:$0xff]
    %v495 = vld [vmem:[%s2 + $0x264] sm:$0xf]
    %v496 = vld [vmem:[%s2 + $0x268] sm:$0xff]
    %v497 = vld [vmem:[%s2 + $0x270] sm:$0xff]
    %v498 = vld [vmem:[%s2 + $0x278] sm:$0xff]
    %v499 = vld [vmem:[%s2 + $0x280] sm:$0xf]
    %v500 = vld [vmem:[%s2 + $0x284] sm:$0xff]
    %v501 = vld [vmem:[%s2 + $0x28c] sm:$0xff]
    %v502 = vld [vmem:[%s2 + $0x294] sm:$0xff]
    %v503 = vld [vmem:[%s2 + $0x29c] sm:$0xf]
    %v504 = vld [vmem:[%s2 + $0x2a0] sm:$0xff]
    %v505 = vld [vmem:[%s2 + $0x2a8] sm:$0xff]
    %v506 = vld [vmem:[%s2 + $0x2b0] sm:$0xff]
    %v507 = vld [vmem:[%s2 + $0x2b8] sm:$0xf]
    %v508 = vld [vmem:[%s2 + $0x2bc] sm:$0xff]
    %v509 = vld [vmem:[%s2 + $0x2c4] sm:$0xff]
    %v510 = vld [vmem:[%s2 + $0x2cc] sm:$0xff]
    %v511 = vld [vmem:[%s2 + $0x2d4] sm:$0xf]
    %v512 = vld [vmem:[%s2 + $0x2d8] sm:$0xff]
    %v513 = vld [vmem:[%s2 + $0x2e0] sm:$0xff]
    %v514 = vld [vmem:[%s2 + $0x2e8] sm:$0xff]
    %v515 = vld [vmem:[%s2 + $0x2f0] sm:$0xf]
    %v516 = vld [vmem:[%s2 + $0x2f4] sm:$0xff]
    %v517 = vld [vmem:[%s2 + $0x2fc] sm:$0xff]
    %v518 = vld [vmem:[%s2 + $0x304] sm:$0xff]
    %v519 = vld [vmem:[%s2 + $0x30c] sm:$0xf]
    %v520 = vld [vmem:[%s2 + $0x310] sm:$0xff]
    %v521 = vld [vmem:[%s2 + $0x318] sm:$0xff]
    %v522 = vld [vmem:[%s2 + $0x320] sm:$0xff]
    %v523 = vld [vmem:[%s2 + $0x328] sm:$0xf]
    %v524 = vld [vmem:[%s2 + $0x32c] sm:$0xff]
    %v525 = vld [vmem:[%s2 + $0x334] sm:$0xff]
    %v526 = vld [vmem:[%s2 + $0x33c] sm:$0xff]
    %v527 = vld [vmem:[%s2 + $0x344] sm:$0xf]
    %v528 = vld [vmem:[%s2 + $0x348] sm:$0xff]
    %v529 = vld [vmem:[%s2 + $0x350] sm:$0xff]
    %v530 = vld [vmem:[%s2 + $0x358] sm:$0xff]
    %v531 = vld [vmem:[%s2 + $0x360] sm:$0xf]
    %v532 = vld [vmem:[%s2 + $0x364] sm:$0xff]
    %v533 = vld [vmem:[%s2 + $0x36c] sm:$0xff]
    %v534 = vld [vmem:[%s2 + $0x374] sm:$0xff]
    %v535 = vld [vmem:[%s2 + $0x37c] sm:$0xf]
    %v537 = vperm.slane %v71, 0
    %v538 = vperm.slane %v71, 1
    %v539 = vperm.slane %v71, 2
    %v540 = vperm.slane %v71, 3
    %v541 = vperm.slane %v71, 4
    %v542 = vperm.slane %v71, 5
    %v543 = vperm.slane %v71, 6
    %v679 = vunpack.c.l.b16 %v408
    %v680 = vunpack.c.h.b16 %v408
    %v681 = vunpack.c.l.b16 %v409
    %v682 = vunpack.c.h.b16 %v409
    %v683 = vunpack.c.l.b16 %v410
    %v684 = vunpack.c.h.b16 %v410
    %v685 = vunpack.c.l.b16 %v411
    %v686 = vunpack.c.l.b16 %v412
    %v687 = vunpack.c.h.b16 %v412
    %v688 = vunpack.c.l.b16 %v413
    %v689 = vunpack.c.h.b16 %v413
    %v690 = vunpack.c.l.b16 %v414
    %v691 = vunpack.c.h.b16 %v414
    %v692 = vunpack.c.l.b16 %v415
    %v693 = vunpack.c.l.b16 %v416
    %v694 = vunpack.c.h.b16 %v416
    %v695 = vunpack.c.l.b16 %v417
    %v696 = vunpack.c.h.b16 %v417
    %v697 = vunpack.c.l.b16 %v418
    %v698 = vunpack.c.h.b16 %v418
    %v699 = vunpack.c.l.b16 %v419
    %v700 = vunpack.c.l.b16 %v420
    %v701 = vunpack.c.h.b16 %v420
    %v702 = vunpack.c.l.b16 %v421
    %v703 = vunpack.c.h.b16 %v421
    %v704 = vunpack.c.l.b16 %v422
    %v705 = vunpack.c.h.b16 %v422
    %v706 = vunpack.c.l.b16 %v423
    %v707 = vunpack.c.l.b16 %v424
    %v708 = vunpack.c.h.b16 %v424
    %v709 = vunpack.c.l.b16 %v425
    %v710 = vunpack.c.h.b16 %v425
    %v711 = vunpack.c.l.b16 %v426
    %v712 = vunpack.c.h.b16 %v426
    %v713 = vunpack.c.l.b16 %v427
    %v714 = vunpack.c.l.b16 %v428
    %v715 = vunpack.c.h.b16 %v428
    %v716 = vunpack.c.l.b16 %v429
    %v717 = vunpack.c.h.b16 %v429
    %v718 = vunpack.c.l.b16 %v430
    %v719 = vunpack.c.h.b16 %v430
    %v720 = vunpack.c.l.b16 %v431
    %v721 = vunpack.c.l.b16 %v432
    %v722 = vunpack.c.h.b16 %v432
    %v723 = vunpack.c.l.b16 %v433
    %v724 = vunpack.c.h.b16 %v433
    %v725 = vunpack.c.l.b16 %v434
    %v726 = vunpack.c.h.b16 %v434
    %v727 = vunpack.c.l.b16 %v435
    %v728 = vunpack.c.l.b16 %v436
    %v729 = vunpack.c.h.b16 %v436
    %v730 = vunpack.c.l.b16 %v437
    %v731 = vunpack.c.h.b16 %v437
    %v732 = vunpack.c.l.b16 %v438
    %v733 = vunpack.c.h.b16 %v438
    %v734 = vunpack.c.l.b16 %v439
    %v735 = vunpack.c.l.b16 %v440
    %v736 = vunpack.c.h.b16 %v440
    %v737 = vunpack.c.l.b16 %v441
    %v738 = vunpack.c.h.b16 %v441
    %v739 = vunpack.c.l.b16 %v442
    %v740 = vunpack.c.h.b16 %v442
    %v741 = vunpack.c.l.b16 %v443
    %v742 = vunpack.c.l.b16 %v444
    %v743 = vunpack.c.h.b16 %v444
    %v744 = vunpack.c.l.b16 %v445
    %v745 = vunpack.c.h.b16 %v445
    %v746 = vunpack.c.l.b16 %v446
    %v747 = vunpack.c.h.b16 %v446
    %v748 = vunpack.c.l.b16 %v447
    %v749 = vunpack.c.l.b16 %v448
    %v750 = vunpack.c.h.b16 %v448
    %v751 = vunpack.c.l.b16 %v449
    %v752 = vunpack.c.h.b16 %v449
    %v753 = vunpack.c.l.b16 %v450
    %v754 = vunpack.c.h.b16 %v450
    %v755 = vunpack.c.l.b16 %v451
    %v756 = vunpack.c.l.b16 %v452
    %v757 = vunpack.c.h.b16 %v452
    %v758 = vunpack.c.l.b16 %v453
    %v759 = vunpack.c.h.b16 %v453
    %v760 = vunpack.c.l.b16 %v454
    %v761 = vunpack.c.h.b16 %v454
    %v762 = vunpack.c.l.b16 %v455
    %v763 = vunpack.c.l.b16 %v456
    %v764 = vunpack.c.h.b16 %v456
    %v765 = vunpack.c.l.b16 %v457
    %v766 = vunpack.c.h.b16 %v457
    %v767 = vunpack.c.l.b16 %v458
    %v768 = vunpack.c.h.b16 %v458
    %v769 = vunpack.c.l.b16 %v459
    %v770 = vunpack.c.l.b16 %v460
    %v771 = vunpack.c.h.b16 %v460
    %v772 = vunpack.c.l.b16 %v461
    %v773 = vunpack.c.h.b16 %v461
    %v774 = vunpack.c.l.b16 %v462
    %v775 = vunpack.c.h.b16 %v462
    %v776 = vunpack.c.l.b16 %v463
    %v777 = vunpack.c.l.b16 %v464
    %v778 = vunpack.c.h.b16 %v464
    %v779 = vunpack.c.l.b16 %v465
    %v780 = vunpack.c.h.b16 %v465
    %v781 = vunpack.c.l.b16 %v466
    %v782 = vunpack.c.h.b16 %v466
    %v783 = vunpack.c.l.b16 %v467
    %v784 = vunpack.c.l.b16 %v468
    %v785 = vunpack.c.h.b16 %v468
    %v786 = vunpack.c.l.b16 %v469
    %v787 = vunpack.c.h.b16 %v469
    %v788 = vunpack.c.l.b16 %v470
    %v789 = vunpack.c.h.b16 %v470
    %v790 = vunpack.c.l.b16 %v471
    %v791 = vunpack.c.l.b16 %v472
    %v792 = vunpack.c.h.b16 %v472
    %v793 = vunpack.c.l.b16 %v473
    %v794 = vunpack.c.h.b16 %v473
    %v795 = vunpack.c.l.b16 %v474
    %v796 = vunpack.c.h.b16 %v474
    %v797 = vunpack.c.l.b16 %v475
    %v798 = vunpack.c.l.b16 %v476
    %v799 = vunpack.c.h.b16 %v476
    %v800 = vunpack.c.l.b16 %v477
    %v801 = vunpack.c.h.b16 %v477
    %v802 = vunpack.c.l.b16 %v478
    %v803 = vunpack.c.h.b16 %v478
    %v804 = vunpack.c.l.b16 %v479
    %v805 = vunpack.c.l.b16 %v480
    %v806 = vunpack.c.h.b16 %v480
    %v807 = vunpack.c.l.b16 %v481
    %v808 = vunpack.c.h.b16 %v481
    %v809 = vunpack.c.l.b16 %v482
    %v810 = vunpack.c.h.b16 %v482
    %v811 = vunpack.c.l.b16 %v483
    %v812 = vunpack.c.l.b16 %v484
    %v813 = vunpack.c.h.b16 %v484
    %v814 = vunpack.c.l.b16 %v485
    %v815 = vunpack.c.h.b16 %v485
    %v816 = vunpack.c.l.b16 %v486
    %v817 = vunpack.c.h.b16 %v486
    %v818 = vunpack.c.l.b16 %v487
    %v819 = vunpack.c.l.b16 %v488
    %v820 = vunpack.c.h.b16 %v488
    %v821 = vunpack.c.l.b16 %v489
    %v822 = vunpack.c.h.b16 %v489
    %v823 = vunpack.c.l.b16 %v490
    %v824 = vunpack.c.h.b16 %v490
    %v825 = vunpack.c.l.b16 %v491
    %v826 = vunpack.c.l.b16 %v492
    %v827 = vunpack.c.h.b16 %v492
    %v828 = vunpack.c.l.b16 %v493
    %v829 = vunpack.c.h.b16 %v493
    %v830 = vunpack.c.l.b16 %v494
    %v831 = vunpack.c.h.b16 %v494
    %v832 = vunpack.c.l.b16 %v495
    %v833 = vunpack.c.l.b16 %v496
    %v834 = vunpack.c.h.b16 %v496
    %v835 = vunpack.c.l.b16 %v497
    %v836 = vunpack.c.h.b16 %v497
    %v837 = vunpack.c.l.b16 %v498
    %v838 = vunpack.c.h.b16 %v498
    %v839 = vunpack.c.l.b16 %v499
    %v840 = vunpack.c.l.b16 %v500
    %v841 = vunpack.c.h.b16 %v500
    %v842 = vunpack.c.l.b16 %v501
    %v843 = vunpack.c.h.b16 %v501
    %v844 = vunpack.c.l.b16 %v502
    %v845 = vunpack.c.h.b16 %v502
    %v846 = vunpack.c.l.b16 %v503
    %v847 = vunpack.c.l.b16 %v504
    %v848 = vunpack.c.h.b16 %v504
    %v849 = vunpack.c.l.b16 %v505
    %v850 = vunpack.c.h.b16 %v505
    %v851 = vunpack.c.l.b16 %v506
    %v852 = vunpack.c.h.b16 %v506
    %v853 = vunpack.c.l.b16 %v507
    %v854 = vunpack.c.l.b16 %v508
    %v855 = vunpack.c.h.b16 %v508
    %v856 = vunpack.c.l.b16 %v509
    %v857 = vunpack.c.h.b16 %v509
    %v858 = vunpack.c.l.b16 %v510
    %v859 = vunpack.c.h.b16 %v510
    %v860 = vunpack.c.l.b16 %v511
    %v861 = vunpack.c.l.b16 %v512
    %v862 = vunpack.c.h.b16 %v512
    %v863 = vunpack.c.l.b16 %v513
    %v864 = vunpack.c.h.b16 %v513
    %v865 = vunpack.c.l.b16 %v514
    %v866 = vunpack.c.h.b16 %v514
    %v867 = vunpack.c.l.b16 %v515
    %v868 = vunpack.c.l.b16 %v516
    %v869 = vunpack.c.h.b16 %v516
    %v870 = vunpack.c.l.b16 %v517
    %v871 = vunpack.c.h.b16 %v517
    %v872 = vunpack.c.l.b16 %v518
    %v873 = vunpack.c.h.b16 %v518
    %v874 = vunpack.c.l.b16 %v519
    %v875 = vunpack.c.l.b16 %v520
    %v876 = vunpack.c.h.b16 %v520
    %v877 = vunpack.c.l.b16 %v521
    %v878 = vunpack.c.h.b16 %v521
    %v879 = vunpack.c.l.b16 %v522
    %v880 = vunpack.c.h.b16 %v522
    %v881 = vunpack.c.l.b16 %v523
    %v882 = vunpack.c.l.b16 %v524
    %v883 = vunpack.c.h.b16 %v524
    %v884 = vunpack.c.l.b16 %v525
    %v885 = vunpack.c.h.b16 %v525
    %v886 = vunpack.c.l.b16 %v526
    %v887 = vunpack.c.h.b16 %v526
    %v888 = vunpack.c.l.b16 %v527
    %v889 = vunpack.c.l.b16 %v528
    %v890 = vunpack.c.h.b16 %v528
    %v891 = vunpack.c.l.b16 %v529
    %v892 = vunpack.c.h.b16 %v529
    %v893 = vunpack.c.l.b16 %v530
    %v894 = vunpack.c.h.b16 %v530
    %v895 = vunpack.c.l.b16 %v531
    %v896 = vunpack.c.l.b16 %v532
    %v897 = vunpack.c.h.b16 %v532
    %v898 = vunpack.c.l.b16 %v533
    %v899 = vunpack.c.h.b16 %v533
    %v900 = vunpack.c.l.b16 %v534
    %v901 = vunpack.c.h.b16 %v534
    %v902 = vunpack.c.l.b16 %v535
    %v903 = vpack.c.b16 %v686, %v679
    %v904 = vpack.c.b16 %v687, %v680
    %v905 = vpack.c.b16 %v688, %v681
    %v906 = vpack.c.b16 %v689, %v682
    %v907 = vpack.c.b16 %v690, %v683
    %v908 = vpack.c.b16 %v691, %v684
    %v909 = vpack.c.b16 %v692, %v685
    %v910 = vpack.c.b16 %v700, %v693
    %v911 = vpack.c.b16 %v701, %v694
    %v912 = vpack.c.b16 %v702, %v695
    %v913 = vpack.c.b16 %v703, %v696
    %v914 = vpack.c.b16 %v704, %v697
    %v915 = vpack.c.b16 %v705, %v698
    %v916 = vpack.c.b16 %v706, %v699
    %v917 = vpack.c.b16 %v714, %v707
    %v918 = vpack.c.b16 %v715, %v708
    %v919 = vpack.c.b16 %v716, %v709
    %v920 = vpack.c.b16 %v717, %v710
    %v921 = vpack.c.b16 %v718, %v711
    %v922 = vpack.c.b16 %v719, %v712
    %v923 = vpack.c.b16 %v720, %v713
    %v924 = vpack.c.b16 %v728, %v721
    %v925 = vpack.c.b16 %v729, %v722
    %v926 = vpack.c.b16 %v730, %v723
    %v927 = vpack.c.b16 %v731, %v724
    %v928 = vpack.c.b16 %v732, %v725
    %v929 = vpack.c.b16 %v733, %v726
    %v930 = vpack.c.b16 %v734, %v727
    %v931 = vpack.c.b16 %v742, %v735
    %v932 = vpack.c.b16 %v743, %v736
    %v933 = vpack.c.b16 %v744, %v737
    %v934 = vpack.c.b16 %v745, %v738
    %v935 = vpack.c.b16 %v746, %v739
    %v936 = vpack.c.b16 %v747, %v740
    %v937 = vpack.c.b16 %v748, %v741
    %v938 = vpack.c.b16 %v756, %v749
    %v939 = vpack.c.b16 %v757, %v750
    %v940 = vpack.c.b16 %v758, %v751
    %v941 = vpack.c.b16 %v759, %v752
    %v942 = vpack.c.b16 %v760, %v753
    %v943 = vpack.c.b16 %v761, %v754
    %v944 = vpack.c.b16 %v762, %v755
    %v945 = vpack.c.b16 %v770, %v763
    %v946 = vpack.c.b16 %v771, %v764
    %v947 = vpack.c.b16 %v772, %v765
    %v948 = vpack.c.b16 %v773, %v766
    %v949 = vpack.c.b16 %v774, %v767
    %v950 = vpack.c.b16 %v775, %v768
    %v951 = vpack.c.b16 %v776, %v769
    %v952 = vpack.c.b16 %v784, %v777
    %v953 = vpack.c.b16 %v785, %v778
    %v954 = vpack.c.b16 %v786, %v779
    %v955 = vpack.c.b16 %v787, %v780
    %v956 = vpack.c.b16 %v788, %v781
    %v957 = vpack.c.b16 %v789, %v782
    %v958 = vpack.c.b16 %v790, %v783
    %v959 = vpack.c.b16 %v798, %v791
    %v960 = vpack.c.b16 %v799, %v792
    %v961 = vpack.c.b16 %v800, %v793
    %v962 = vpack.c.b16 %v801, %v794
    %v963 = vpack.c.b16 %v802, %v795
    %v964 = vpack.c.b16 %v803, %v796
    %v965 = vpack.c.b16 %v804, %v797
    %v966 = vpack.c.b16 %v812, %v805
    %v967 = vpack.c.b16 %v813, %v806
    %v968 = vpack.c.b16 %v814, %v807
    %v969 = vpack.c.b16 %v815, %v808
    %v970 = vpack.c.b16 %v816, %v809
    %v971 = vpack.c.b16 %v817, %v810
    %v972 = vpack.c.b16 %v818, %v811
    %v973 = vpack.c.b16 %v826, %v819
    %v974 = vpack.c.b16 %v827, %v820
    %v975 = vpack.c.b16 %v828, %v821
    %v976 = vpack.c.b16 %v829, %v822
    %v977 = vpack.c.b16 %v830, %v823
    %v978 = vpack.c.b16 %v831, %v824
    %v979 = vpack.c.b16 %v832, %v825
    %v980 = vpack.c.b16 %v840, %v833
    %v981 = vpack.c.b16 %v841, %v834
    %v982 = vpack.c.b16 %v842, %v835
    %v983 = vpack.c.b16 %v843, %v836
    %v984 = vpack.c.b16 %v844, %v837
    %v985 = vpack.c.b16 %v845, %v838
    %v986 = vpack.c.b16 %v846, %v839
    %v987 = vpack.c.b16 %v854, %v847
    %v988 = vpack.c.b16 %v855, %v848
    %v989 = vpack.c.b16 %v856, %v849
    %v990 = vpack.c.b16 %v857, %v850
    %v991 = vpack.c.b16 %v858, %v851
    %v992 = vpack.c.b16 %v859, %v852
    %v993 = vpack.c.b16 %v860, %v853
    %v994 = vpack.c.b16 %v868, %v861
    %v995 = vpack.c.b16 %v869, %v862
    %v996 = vpack.c.b16 %v870, %v863
    %v997 = vpack.c.b16 %v871, %v864
    %v998 = vpack.c.b16 %v872, %v865
    %v999 = vpack.c.b16 %v873, %v866
    %v1000 = vpack.c.b16 %v874, %v867
    %v1001 = vpack.c.b16 %v882, %v875
    %v1002 = vpack.c.b16 %v883, %v876
    %v1003 = vpack.c.b16 %v884, %v877
    %v1004 = vpack.c.b16 %v885, %v878
    %v1005 = vpack.c.b16 %v886, %v879
    %v1006 = vpack.c.b16 %v887, %v880
    %v1007 = vpack.c.b16 %v888, %v881
    %v1008 = vpack.c.b16 %v896, %v889
    %v1009 = vpack.c.b16 %v897, %v890
    %v1010 = vpack.c.b16 %v898, %v891
    %v1011 = vpack.c.b16 %v899, %v892
    %v1012 = vpack.c.b16 %v900, %v893
    %v1013 = vpack.c.b16 %v901, %v894
    %v1014 = vpack.c.b16 %v902, %v895
    %1127 = vmatpush.bf16.msra.mxu0 %v952
    %1128 = vmatpush.bf16.msra.mxu0 %v945
    %1129 = vmatpush.bf16.msra.mxu0 %v938
    %1130 = vmatpush.bf16.msra.mxu0 %v931
    %1131 = vmatpush.bf16.msra.mxu0 %v924
    %1132 = vmatpush.bf16.msra.mxu0 %v917
    %1133 = vmatpush.bf16.msra.mxu0 %v910
    %1134 = vmatpush.bf16.msra.mxu0 %v903
    %1135 = vmatmul.bf16.gmra.mxu0 %v406
    %v1136 = vpop.f32.mrf.mxu0
    %v1137 = vadd.f32 %v537, %v1136
    %v1138 = vpop.f32.mrf.mxu0
    %1139 = vdwg.mxu0
    %1140 = vmatpush.bf16.msra.mxu0 %v1008
    %1141 = vmatpush.bf16.msra.mxu0 %v1001
    %1142 = vmatpush.bf16.msra.mxu0 %v994
    %1143 = vmatpush.bf16.msra.mxu0 %v987
    %1144 = vmatpush.bf16.msra.mxu0 %v980
    %1145 = vmatpush.bf16.msra.mxu0 %v973
    %1146 = vmatpush.bf16.msra.mxu0 %v966
    %1147 = vmatpush.bf16.msra.mxu0 %v959
    %1148 = vmatmul.bf16.gmra.mxu0 %v407
    %v1149 = vpop.f32.mrf.mxu0
    %v1150 = vadd.f32 %v1137, %v1149
    %v1151 = vpop.f32.mrf.mxu0
    %1152 = vdwg.mxu0
    %1153 = vmatpush.bf16.msra.mxu0 %v953
    %1154 = vmatpush.bf16.msra.mxu0 %v946
    %1155 = vmatpush.bf16.msra.mxu0 %v939
    %1156 = vmatpush.bf16.msra.mxu0 %v932
    %1157 = vmatpush.bf16.msra.mxu0 %v925
    %1158 = vmatpush.bf16.msra.mxu0 %v918
    %1159 = vmatpush.bf16.msra.mxu0 %v911
    %1160 = vmatpush.bf16.msra.mxu0 %v904
    %1161 = vmatmul.bf16.gmra.mxu0 %v406
    %v1162 = vpop.f32.mrf.mxu0
    %v1163 = vadd.f32 %v538, %v1162
    %v1164 = vpop.f32.mrf.mxu0
    %1165 = vdwg.mxu0
    %1166 = vmatpush.bf16.msra.mxu0 %v1009
    %1167 = vmatpush.bf16.msra.mxu0 %v1002
    %1168 = vmatpush.bf16.msra.mxu0 %v995
    %1169 = vmatpush.bf16.msra.mxu0 %v988
    %1170 = vmatpush.bf16.msra.mxu0 %v981
    %1171 = vmatpush.bf16.msra.mxu0 %v974
    %1172 = vmatpush.bf16.msra.mxu0 %v967
    %1173 = vmatpush.bf16.msra.mxu0 %v960
    %1174 = vmatmul.bf16.gmra.mxu0 %v407
    %v1175 = vpop.f32.mrf.mxu0
    %v1176 = vadd.f32 %v1163, %v1175
    %v1177 = vpop.f32.mrf.mxu0
    %1178 = vdwg.mxu0
    %1179 = vmatpush.bf16.msra.mxu0 %v954
    %1180 = vmatpush.bf16.msra.mxu0 %v947
    %1181 = vmatpush.bf16.msra.mxu0 %v940
    %1182 = vmatpush.bf16.msra.mxu0 %v933
    %1183 = vmatpush.bf16.msra.mxu0 %v926
    %1184 = vmatpush.bf16.msra.mxu0 %v919
    %1185 = vmatpush.bf16.msra.mxu0 %v912
    %1186 = vmatpush.bf16.msra.mxu0 %v905
    %1187 = vmatmul.bf16.gmra.mxu0 %v406
    %v1188 = vpop.f32.mrf.mxu0
    %v1189 = vadd.f32 %v539, %v1188
    %v1190 = vpop.f32.mrf.mxu0
    %1191 = vdwg.mxu0
    %1192 = vmatpush.bf16.msra.mxu0 %v1010
    %1193 = vmatpush.bf16.msra.mxu0 %v1003
    %1194 = vmatpush.bf16.msra.mxu0 %v996
    %1195 = vmatpush.bf16.msra.mxu0 %v989
    %1196 = vmatpush.bf16.msra.mxu0 %v982
    %1197 = vmatpush.bf16.msra.mxu0 %v975
    %1198 = vmatpush.bf16.msra.mxu0 %v968
    %1199 = vmatpush.bf16.msra.mxu0 %v961
    %1200 = vmatmul.bf16.gmra.mxu0 %v407
    %v1201 = vpop.f32.mrf.mxu0
    %v1202 = vadd.f32 %v1189, %v1201
    %v1203 = vpop.f32.mrf.mxu0
    %1204 = vdwg.mxu0
    %1205 = vmatpush.bf16.msra.mxu0 %v955
    %1206 = vmatpush.bf16.msra.mxu0 %v948
    %1207 = vmatpush.bf16.msra.mxu0 %v941
    %1208 = vmatpush.bf16.msra.mxu0 %v934
    %1209 = vmatpush.bf16.msra.mxu0 %v927
    %1210 = vmatpush.bf16.msra.mxu0 %v920
    %1211 = vmatpush.bf16.msra.mxu0 %v913
    %1212 = vmatpush.bf16.msra.mxu0 %v906
    %1213 = vmatmul.bf16.gmra.mxu0 %v406
    %v1214 = vpop.f32.mrf.mxu0
    %v1215 = vadd.f32 %v540, %v1214
    %v1216 = vpop.f32.mrf.mxu0
    %1217 = vdwg.mxu0
    %1218 = vmatpush.bf16.msra.mxu0 %v1011
    %1219 = vmatpush.bf16.msra.mxu0 %v1004
    %1220 = vmatpush.bf16.msra.mxu0 %v997
    %1221 = vmatpush.bf16.msra.mxu0 %v990
    %1222 = vmatpush.bf16.msra.mxu0 %v983
    %1223 = vmatpush.bf16.msra.mxu0 %v976
    %1224 = vmatpush.bf16.msra.mxu0 %v969
    %1225 = vmatpush.bf16.msra.mxu0 %v962
    %1226 = vmatmul.bf16.gmra.mxu0 %v407
    %v1227 = vpop.f32.mrf.mxu0
    %v1228 = vadd.f32 %v1215, %v1227
    %v1229 = vpop.f32.mrf.mxu0
    %1230 = vdwg.mxu0
    %1231 = vmatpush.bf16.msra.mxu0 %v956
    %1232 = vmatpush.bf16.msra.mxu0 %v949
    %1233 = vmatpush.bf16.msra.mxu0 %v942
    %1234 = vmatpush.bf16.msra.mxu0 %v935
    %1235 = vmatpush.bf16.msra.mxu0 %v928
    %1236 = vmatpush.bf16.msra.mxu0 %v921
    %1237 = vmatpush.bf16.msra.mxu0 %v914
    %1238 = vmatpush.bf16.msra.mxu0 %v907
    %1239 = vmatmul.bf16.gmra.mxu0 %v406
    %v1240 = vpop.f32.mrf.mxu0
    %v1241 = vadd.f32 %v541, %v1240
    %v1242 = vpop.f32.mrf.mxu0
    %1243 = vdwg.mxu0
    %1244 = vmatpush.bf16.msra.mxu0 %v1012
    %1245 = vmatpush.bf16.msra.mxu0 %v1005
    %1246 = vmatpush.bf16.msra.mxu0 %v998
    %1247 = vmatpush.bf16.msra.mxu0 %v991
    %1248 = vmatpush.bf16.msra.mxu0 %v984
    %1249 = vmatpush.bf16.msra.mxu0 %v977
    %1250 = vmatpush.bf16.msra.mxu0 %v970
    %1251 = vmatpush.bf16.msra.mxu0 %v963
    %1252 = vmatmul.bf16.gmra.mxu0 %v407
    %v1253 = vpop.f32.mrf.mxu0
    %v1254 = vadd.f32 %v1241, %v1253
    %v1255 = vpop.f32.mrf.mxu0
    %1256 = vdwg.mxu0
    %1257 = vmatpush.bf16.msra.mxu0 %v957
    %1258 = vmatpush.bf16.msra.mxu0 %v950
    %1259 = vmatpush.bf16.msra.mxu0 %v943
    %1260 = vmatpush.bf16.msra.mxu0 %v936
    %1261 = vmatpush.bf16.msra.mxu0 %v929
    %1262 = vmatpush.bf16.msra.mxu0 %v922
    %1263 = vmatpush.bf16.msra.mxu0 %v915
    %1264 = vmatpush.bf16.msra.mxu0 %v908
    %1265 = vmatmul.bf16.gmra.mxu0 %v406
    %v1266 = vpop.f32.mrf.mxu0
    %v1267 = vadd.f32 %v542, %v1266
    %v1268 = vpop.f32.mrf.mxu0
    %1269 = vdwg.mxu0
    %1270 = vmatpush.bf16.msra.mxu0 %v1013
    %1271 = vmatpush.bf16.msra.mxu0 %v1006
    %1272 = vmatpush.bf16.msra.mxu0 %v999
    %1273 = vmatpush.bf16.msra.mxu0 %v992
    %1274 = vmatpush.bf16.msra.mxu0 %v985
    %1275 = vmatpush.bf16.msra.mxu0 %v978
    %1276 = vmatpush.bf16.msra.mxu0 %v971
    %1277 = vmatpush.bf16.msra.mxu0 %v964
    %1278 = vmatmul.bf16.gmra.mxu0 %v407
    %v1279 = vpop.f32.mrf.mxu0
    %v1280 = vadd.f32 %v1267, %v1279
    %v1281 = vpop.f32.mrf.mxu0
    %1282 = vdwg.mxu0
    %1283 = vmatpush.bf16.msra.mxu0 %v958
    %1284 = vmatpush.bf16.msra.mxu0 %v951
    %1285 = vmatpush.bf16.msra.mxu0 %v944
    %1286 = vmatpush.bf16.msra.mxu0 %v937
    %1287 = vmatpush.bf16.msra.mxu0 %v930
    %1288 = vmatpush.bf16.msra.mxu0 %v923
    %1289 = vmatpush.bf16.msra.mxu0 %v916
    %1290 = vmatpush.bf16.msra.mxu0 %v909
    %1291 = vmatmul.bf16.gmra.mxu0 %v406
    %v1292 = vpop.f32.mrf.mxu0
    %v1293 = vadd.f32 %v543, %v1292
    %v1294 = vpop.f32.mrf.mxu0
    %1295 = vdwg.mxu0
    %1296 = vmatpush.bf16.msra.mxu0 %v1014
    %1297 = vmatpush.bf16.msra.mxu0 %v1007
    %1298 = vmatpush.bf16.msra.mxu0 %v1000
    %1299 = vmatpush.bf16.msra.mxu0 %v993
    %1300 = vmatpush.bf16.msra.mxu0 %v986
    %1301 = vmatpush.bf16.msra.mxu0 %v979
    %1302 = vmatpush.bf16.msra.mxu0 %v972
    %1303 = vmatpush.bf16.msra.mxu0 %v965
    %1304 = vmatmul.bf16.gmra.mxu0 %v407
    %v1305 = vpop.f32.mrf.mxu0
    %v1306 = vadd.f32 %v1293, %v1305
    %v1307 = vpop.f32.mrf.mxu0
    %1308 = vdwg.mxu0
    %v1309 = vmax.f32 %v1150, 0.0
    %v1310 = vmax.f32 %v1176, 0.0
    %v1311 = vmax.f32 %v1202, 0.0
    %v1312 = vmax.f32 %v1228, 0.0
    %v1313 = vmax.f32 %v1254, 0.0
    %v1314 = vmax.f32 %v1280, 0.0
    %v1315 = vmax.f32 %v1306, 0.0
    %v1316 = vpack.c.bf16 %v1309, %v1309
    %v1317 = vpack.c.bf16 %v1310, %v1310
    %v1318 = vpack.c.bf16 %v1311, %v1311
    %v1319 = vpack.c.bf16 %v1312, %v1312
    %v1320 = vpack.c.bf16 %v1313, %v1313
    %v1321 = vpack.c.bf16 %v1314, %v1314
    %v1322 = vpack.c.bf16 %v1315, %v1315
    %v1323 = vld [vmem:[%s3] sm:$0xf]
    %v1324 = vld [vmem:[%s3 + $0x4] sm:$0xf]
    %v1325 = vld [vmem:[%s3 + $0x8] sm:$0xf]
    %v1326 = vld [vmem:[%s3 + $0xc] sm:$0xf]
    %v1327 = vld [vmem:[%s3 + $0x10] sm:$0xf]
    %v1328 = vld [vmem:[%s3 + $0x14] sm:$0xf]
    %v1329 = vld [vmem:[%s3 + $0x18] sm:$0xf]
    %v1330 = vld [vmem:[%s3 + $0x1c] sm:$0xf]
    %v1331 = vld [vmem:[%s3 + $0x20] sm:$0xf]
    %v1332 = vld [vmem:[%s3 + $0x24] sm:$0xf]
    %v1333 = vld [vmem:[%s3 + $0x28] sm:$0xf]
    %v1334 = vld [vmem:[%s3 + $0x2c] sm:$0xf]
    %v1335 = vld [vmem:[%s3 + $0x30] sm:$0xf]
    %v1336 = vld [vmem:[%s3 + $0x34] sm:$0xf]
    %v1337 = vld [vmem:[%s3 + $0x38] sm:$0xf]
    %v1338 = vld [vmem:[%s3 + $0x3c] sm:$0xf]
    %v1339 = vld [vmem:[%s3 + $0x40] sm:$0xf]
    %v1340 = vld [vmem:[%s3 + $0x44] sm:$0xf]
    %v1341 = vld [vmem:[%s3 + $0x48] sm:$0xf]
    %v1342 = vld [vmem:[%s3 + $0x4c] sm:$0xf]
    %v1343 = vld [vmem:[%s3 + $0x50] sm:$0xf]
    %v1344 = vld [vmem:[%s3 + $0x54] sm:$0xf]
    %v1345 = vld [vmem:[%s3 + $0x58] sm:$0xf]
    %v1346 = vld [vmem:[%s3 + $0x5c] sm:$0xf]
    %v1347 = vld [vmem:[%s3 + $0x60] sm:$0xf]
    %v1348 = vld [vmem:[%s3 + $0x64] sm:$0xf]
    %v1349 = vld [vmem:[%s3 + $0x68] sm:$0xf]
    %v1350 = vld [vmem:[%s3 + $0x6c] sm:$0xf]
    %v1351 = vld [vmem:[%s3 + $0x70] sm:$0xf]
    %v1352 = vld [vmem:[%s3 + $0x74] sm:$0xf]
    %v1353 = vld [vmem:[%s3 + $0x78] sm:$0xf]
    %v1354 = vld [vmem:[%s3 + $0x7c] sm:$0xf]
    %v1355 = vld [vmem:[%s3 + $0x80] sm:$0xf]
    %v1356 = vld [vmem:[%s3 + $0x84] sm:$0xf]
    %v1357 = vld [vmem:[%s3 + $0x88] sm:$0xf]
    %v1358 = vld [vmem:[%s3 + $0x8c] sm:$0xf]
    %v1359 = vld [vmem:[%s3 + $0x90] sm:$0xf]
    %v1360 = vld [vmem:[%s3 + $0x94] sm:$0xf]
    %v1361 = vld [vmem:[%s3 + $0x98] sm:$0xf]
    %v1362 = vld [vmem:[%s3 + $0x9c] sm:$0xf]
    %v1363 = vld [vmem:[%s3 + $0xa0] sm:$0xf]
    %v1364 = vld [vmem:[%s3 + $0xa4] sm:$0xf]
    %v1365 = vld [vmem:[%s3 + $0xa8] sm:$0xf]
    %v1366 = vld [vmem:[%s3 + $0xac] sm:$0xf]
    %v1367 = vld [vmem:[%s3 + $0xb0] sm:$0xf]
    %v1368 = vld [vmem:[%s3 + $0xb4] sm:$0xf]
    %v1369 = vld [vmem:[%s3 + $0xb8] sm:$0xf]
    %v1370 = vld [vmem:[%s3 + $0xbc] sm:$0xf]
    %v1371 = vld [vmem:[%s3 + $0xc0] sm:$0xf]
    %v1372 = vld [vmem:[%s3 + $0xc4] sm:$0xf]
    %v1373 = vld [vmem:[%s3 + $0xc8] sm:$0xf]
    %v1374 = vld [vmem:[%s3 + $0xcc] sm:$0xf]
    %v1375 = vld [vmem:[%s3 + $0xd0] sm:$0xf]
    %v1376 = vld [vmem:[%s3 + $0xd4] sm:$0xf]
    %v1377 = vld [vmem:[%s3 + $0xd8] sm:$0xf]
    %v1378 = vld [vmem:[%s3 + $0xdc] sm:$0xf]
    %v1379 = vld [vmem:[%s3 + $0xe0] sm:$0xf]
    %v1380 = vld [vmem:[%s3 + $0xe4] sm:$0xf]
    %v1381 = vld [vmem:[%s3 + $0xe8] sm:$0xf]
    %v1382 = vld [vmem:[%s3 + $0xec] sm:$0xf]
    %v1383 = vld [vmem:[%s3 + $0xf0] sm:$0xf]
    %v1384 = vld [vmem:[%s3 + $0xf4] sm:$0xf]
    %v1385 = vld [vmem:[%s3 + $0xf8] sm:$0xf]
    %v1386 = vld [vmem:[%s3 + $0xfc] sm:$0xf]
    %v1387 = vld [vmem:[%s3 + $0x100] sm:$0xf]
    %v1388 = vld [vmem:[%s3 + $0x104] sm:$0xf]
    %v1389 = vld [vmem:[%s3 + $0x108] sm:$0xf]
    %v1390 = vld [vmem:[%s3 + $0x10c] sm:$0xf]
    %v1391 = vld [vmem:[%s3 + $0x110] sm:$0xf]
    %v1392 = vld [vmem:[%s3 + $0x114] sm:$0xf]
    %v1393 = vld [vmem:[%s3 + $0x118] sm:$0xf]
    %v1394 = vld [vmem:[%s3 + $0x11c] sm:$0xf]
    %v1395 = vld [vmem:[%s3 + $0x120] sm:$0xf]
    %v1396 = vld [vmem:[%s3 + $0x124] sm:$0xf]
    %v1397 = vld [vmem:[%s3 + $0x128] sm:$0xf]
    %v1398 = vld [vmem:[%s3 + $0x12c] sm:$0xf]
    %v1399 = vld [vmem:[%s3 + $0x130] sm:$0xf]
    %v1400 = vld [vmem:[%s3 + $0x134] sm:$0xf]
    %v1401 = vld [vmem:[%s3 + $0x138] sm:$0xf]
    %v1402 = vld [vmem:[%s3 + $0x13c] sm:$0xf]
    %v1403 = vld [vmem:[%s3 + $0x140] sm:$0xf]
    %v1404 = vld [vmem:[%s3 + $0x144] sm:$0xf]
    %v1405 = vld [vmem:[%s3 + $0x148] sm:$0xf]
    %v1406 = vld [vmem:[%s3 + $0x14c] sm:$0xf]
    %v1407 = vld [vmem:[%s3 + $0x150] sm:$0xf]
    %v1408 = vld [vmem:[%s3 + $0x154] sm:$0xf]
    %v1409 = vld [vmem:[%s3 + $0x158] sm:$0xf]
    %v1410 = vld [vmem:[%s3 + $0x15c] sm:$0xf]
    %v1411 = vld [vmem:[%s3 + $0x160] sm:$0xf]
    %v1412 = vld [vmem:[%s3 + $0x164] sm:$0xf]
    %v1413 = vld [vmem:[%s3 + $0x168] sm:$0xf]
    %v1414 = vld [vmem:[%s3 + $0x16c] sm:$0xf]
    %v1415 = vld [vmem:[%s3 + $0x170] sm:$0xf]
    %v1416 = vld [vmem:[%s3 + $0x174] sm:$0xf]
    %v1417 = vld [vmem:[%s3 + $0x178] sm:$0xf]
    %v1418 = vld [vmem:[%s3 + $0x17c] sm:$0xf]
    %v1419 = vld [vmem:[%s3 + $0x180] sm:$0xf]
    %v1420 = vld [vmem:[%s3 + $0x184] sm:$0xf]
    %v1422 = vperm.slane %v72, 0
    %v1522 = vunpack.c.l.b16 %v1323
    %v1523 = vunpack.c.l.b16 %v1324
    %v1524 = vunpack.c.l.b16 %v1325
    %v1525 = vunpack.c.l.b16 %v1326
    %v1526 = vunpack.c.l.b16 %v1327
    %v1527 = vunpack.c.l.b16 %v1328
    %v1528 = vunpack.c.l.b16 %v1329
    %v1529 = vunpack.c.l.b16 %v1330
    %v1530 = vunpack.c.l.b16 %v1331
    %v1531 = vunpack.c.l.b16 %v1332
    %v1532 = vunpack.c.l.b16 %v1333
    %v1533 = vunpack.c.l.b16 %v1334
    %v1534 = vunpack.c.l.b16 %v1335
    %v1535 = vunpack.c.l.b16 %v1336
    %v1536 = vunpack.c.l.b16 %v1337
    %v1537 = vunpack.c.l.b16 %v1338
    %v1538 = vunpack.c.l.b16 %v1339
    %v1539 = vunpack.c.l.b16 %v1340
    %v1540 = vunpack.c.l.b16 %v1341
    %v1541 = vunpack.c.l.b16 %v1342
    %v1542 = vunpack.c.l.b16 %v1343
    %v1543 = vunpack.c.l.b16 %v1344
    %v1544 = vunpack.c.l.b16 %v1345
    %v1545 = vunpack.c.l.b16 %v1346
    %v1546 = vunpack.c.l.b16 %v1347
    %v1547 = vunpack.c.l.b16 %v1348
    %v1548 = vunpack.c.l.b16 %v1349
    %v1549 = vunpack.c.l.b16 %v1350
    %v1550 = vunpack.c.l.b16 %v1351
    %v1551 = vunpack.c.l.b16 %v1352
    %v1552 = vunpack.c.l.b16 %v1353
    %v1553 = vunpack.c.l.b16 %v1354
    %v1554 = vunpack.c.l.b16 %v1355
    %v1555 = vunpack.c.l.b16 %v1356
    %v1556 = vunpack.c.l.b16 %v1357
    %v1557 = vunpack.c.l.b16 %v1358
    %v1558 = vunpack.c.l.b16 %v1359
    %v1559 = vunpack.c.l.b16 %v1360
    %v1560 = vunpack.c.l.b16 %v1361
    %v1561 = vunpack.c.l.b16 %v1362
    %v1562 = vunpack.c.l.b16 %v1363
    %v1563 = vunpack.c.l.b16 %v1364
    %v1564 = vunpack.c.l.b16 %v1365
    %v1565 = vunpack.c.l.b16 %v1366
    %v1566 = vunpack.c.l.b16 %v1367
    %v1567 = vunpack.c.l.b16 %v1368
    %v1568 = vunpack.c.l.b16 %v1369
    %v1569 = vunpack.c.l.b16 %v1370
    %v1570 = vunpack.c.l.b16 %v1371
    %v1571 = vunpack.c.l.b16 %v1372
    %v1572 = vunpack.c.l.b16 %v1373
    %v1573 = vunpack.c.l.b16 %v1374
    %v1574 = vunpack.c.l.b16 %v1375
    %v1575 = vunpack.c.l.b16 %v1376
    %v1576 = vunpack.c.l.b16 %v1377
    %v1577 = vunpack.c.l.b16 %v1378
    %v1578 = vunpack.c.l.b16 %v1379
    %v1579 = vunpack.c.l.b16 %v1380
    %v1580 = vunpack.c.l.b16 %v1381
    %v1581 = vunpack.c.l.b16 %v1382
    %v1582 = vunpack.c.l.b16 %v1383
    %v1583 = vunpack.c.l.b16 %v1384
    %v1584 = vunpack.c.l.b16 %v1385
    %v1585 = vunpack.c.l.b16 %v1386
    %v1586 = vunpack.c.l.b16 %v1387
    %v1587 = vunpack.c.l.b16 %v1388
    %v1588 = vunpack.c.l.b16 %v1389
    %v1589 = vunpack.c.l.b16 %v1390
    %v1590 = vunpack.c.l.b16 %v1391
    %v1591 = vunpack.c.l.b16 %v1392
    %v1592 = vunpack.c.l.b16 %v1393
    %v1593 = vunpack.c.l.b16 %v1394
    %v1594 = vunpack.c.l.b16 %v1395
    %v1595 = vunpack.c.l.b16 %v1396
    %v1596 = vunpack.c.l.b16 %v1397
    %v1597 = vunpack.c.l.b16 %v1398
    %v1598 = vunpack.c.l.b16 %v1399
    %v1599 = vunpack.c.l.b16 %v1400
    %v1600 = vunpack.c.l.b16 %v1401
    %v1601 = vunpack.c.l.b16 %v1402
    %v1602 = vunpack.c.l.b16 %v1403
    %v1603 = vunpack.c.l.b16 %v1404
    %v1604 = vunpack.c.l.b16 %v1405
    %v1605 = vunpack.c.l.b16 %v1406
    %v1606 = vunpack.c.l.b16 %v1407
    %v1607 = vunpack.c.l.b16 %v1408
    %v1608 = vunpack.c.l.b16 %v1409
    %v1609 = vunpack.c.l.b16 %v1410
    %v1610 = vunpack.c.l.b16 %v1411
    %v1611 = vunpack.c.l.b16 %v1412
    %v1612 = vunpack.c.l.b16 %v1413
    %v1613 = vunpack.c.l.b16 %v1414
    %v1614 = vunpack.c.l.b16 %v1415
    %v1615 = vunpack.c.l.b16 %v1416
    %v1616 = vunpack.c.l.b16 %v1417
    %v1617 = vunpack.c.l.b16 %v1418
    %v1618 = vunpack.c.l.b16 %v1419
    %v1619 = vunpack.c.l.b16 %v1420
    %v1620 = vpack.c.b16 %v1523, %v1522
    %v1621 = vpack.c.b16 %v1525, %v1524
    %v1622 = vpack.c.b16 %v1527, %v1526
    %v1623 = vpack.c.b16 %v1529, %v1528
    %v1624 = vpack.c.b16 %v1531, %v1530
    %v1625 = vpack.c.b16 %v1533, %v1532
    %v1626 = vpack.c.b16 %v1535, %v1534
    %v1627 = vpack.c.b16 %v1537, %v1536
    %v1628 = vpack.c.b16 %v1539, %v1538
    %v1629 = vpack.c.b16 %v1541, %v1540
    %v1630 = vpack.c.b16 %v1543, %v1542
    %v1631 = vpack.c.b16 %v1545, %v1544
    %v1632 = vpack.c.b16 %v1547, %v1546
    %v1633 = vpack.c.b16 %v1549, %v1548
    %v1634 = vpack.c.b16 %v1551, %v1550
    %v1635 = vpack.c.b16 %v1553, %v1552
    %v1636 = vpack.c.b16 %v1555, %v1554
    %v1637 = vpack.c.b16 %v1557, %v1556
    %v1638 = vpack.c.b16 %v1559, %v1558
    %v1639 = vpack.c.b16 %v1561, %v1560
    %v1640 = vpack.c.b16 %v1563, %v1562
    %v1641 = vpack.c.b16 %v1565, %v1564
    %v1642 = vpack.c.b16 %v1567, %v1566
    %v1643 = vpack.c.b16 %v1569, %v1568
    %v1644 = vpack.c.b16 %v1571, %v1570
    %v1645 = vpack.c.b16 %v1573, %v1572
    %v1646 = vpack.c.b16 %v1575, %v1574
    %v1647 = vpack.c.b16 %v1577, %v1576
    %v1648 = vpack.c.b16 %v1579, %v1578
    %v1649 = vpack.c.b16 %v1581, %v1580
    %v1650 = vpack.c.b16 %v1583, %v1582
    %v1651 = vpack.c.b16 %v1585, %v1584
    %v1652 = vpack.c.b16 %v1587, %v1586
    %v1653 = vpack.c.b16 %v1589, %v1588
    %v1654 = vpack.c.b16 %v1591, %v1590
    %v1655 = vpack.c.b16 %v1593, %v1592
    %v1656 = vpack.c.b16 %v1595, %v1594
    %v1657 = vpack.c.b16 %v1597, %v1596
    %v1658 = vpack.c.b16 %v1599, %v1598
    %v1659 = vpack.c.b16 %v1601, %v1600
    %v1660 = vpack.c.b16 %v1603, %v1602
    %v1661 = vpack.c.b16 %v1605, %v1604
    %v1662 = vpack.c.b16 %v1607, %v1606
    %v1663 = vpack.c.b16 %v1609, %v1608
    %v1664 = vpack.c.b16 %v1611, %v1610
    %v1665 = vpack.c.b16 %v1613, %v1612
    %v1666 = vpack.c.b16 %v1615, %v1614
    %v1667 = vpack.c.b16 %v1617, %v1616
    %v1668 = vpack.c.b16 %v1619, %v1618
    %vm1718 = vcmask 130048
    %v1720 = vsel %vm1718, %v1322, 0
    %1722 = vmatpush.bf16.msra.mxu0 %v1627
    %1723 = vmatpush.bf16.msra.mxu0 %v1626
    %1724 = vmatpush.bf16.msra.mxu0 %v1625
    %1725 = vmatpush.bf16.msra.mxu0 %v1624
    %1726 = vmatpush.bf16.msra.mxu0 %v1623
    %1727 = vmatpush.bf16.msra.mxu0 %v1622
    %1728 = vmatpush.bf16.msra.mxu0 %v1621
    %1729 = vmatpush.bf16.msra.mxu0 %v1620
    %1730 = vmatmul.bf16.gmra.mxu0 %v1316
    %v1731 = vpop.f32.mrf.mxu0
    %v1732 = vadd.f32 %v1422, %v1731
    %v1733 = vpop.f32.mrf.mxu0
    %1734 = vdwg.mxu0
    %1735 = vmatpush.bf16.msra.mxu0 %v1635
    %1736 = vmatpush.bf16.msra.mxu0 %v1634
    %1737 = vmatpush.bf16.msra.mxu0 %v1633
    %1738 = vmatpush.bf16.msra.mxu0 %v1632
    %1739 = vmatpush.bf16.msra.mxu0 %v1631
    %1740 = vmatpush.bf16.msra.mxu0 %v1630
    %1741 = vmatpush.bf16.msra.mxu0 %v1629
    %1742 = vmatpush.bf16.msra.mxu0 %v1628
    %1743 = vmatmul.bf16.gmra.mxu0 %v1317
    %v1744 = vpop.f32.mrf.mxu0
    %v1745 = vadd.f32 %v1732, %v1744
    %v1746 = vpop.f32.mrf.mxu0
    %1747 = vdwg.mxu0
    %1748 = vmatpush.bf16.msra.mxu0 %v1643
    %1749 = vmatpush.bf16.msra.mxu0 %v1642
    %1750 = vmatpush.bf16.msra.mxu0 %v1641
    %1751 = vmatpush.bf16.msra.mxu0 %v1640
    %1752 = vmatpush.bf16.msra.mxu0 %v1639
    %1753 = vmatpush.bf16.msra.mxu0 %v1638
    %1754 = vmatpush.bf16.msra.mxu0 %v1637
    %1755 = vmatpush.bf16.msra.mxu0 %v1636
    %1756 = vmatmul.bf16.gmra.mxu0 %v1318
    %v1757 = vpop.f32.mrf.mxu0
    %v1758 = vadd.f32 %v1745, %v1757
    %v1759 = vpop.f32.mrf.mxu0
    %1760 = vdwg.mxu0
    %1761 = vmatpush.bf16.msra.mxu0 %v1651
    %1762 = vmatpush.bf16.msra.mxu0 %v1650
    %1763 = vmatpush.bf16.msra.mxu0 %v1649
    %1764 = vmatpush.bf16.msra.mxu0 %v1648
    %1765 = vmatpush.bf16.msra.mxu0 %v1647
    %1766 = vmatpush.bf16.msra.mxu0 %v1646
    %1767 = vmatpush.bf16.msra.mxu0 %v1645
    %1768 = vmatpush.bf16.msra.mxu0 %v1644
    %1769 = vmatmul.bf16.gmra.mxu0 %v1319
    %v1770 = vpop.f32.mrf.mxu0
    %v1771 = vadd.f32 %v1758, %v1770
    %v1772 = vpop.f32.mrf.mxu0
    %1773 = vdwg.mxu0
    %1774 = vmatpush.bf16.msra.mxu0 %v1659
    %1775 = vmatpush.bf16.msra.mxu0 %v1658
    %1776 = vmatpush.bf16.msra.mxu0 %v1657
    %1777 = vmatpush.bf16.msra.mxu0 %v1656
    %1778 = vmatpush.bf16.msra.mxu0 %v1655
    %1779 = vmatpush.bf16.msra.mxu0 %v1654
    %1780 = vmatpush.bf16.msra.mxu0 %v1653
    %1781 = vmatpush.bf16.msra.mxu0 %v1652
    %1782 = vmatmul.bf16.gmra.mxu0 %v1320
    %v1783 = vpop.f32.mrf.mxu0
    %v1784 = vadd.f32 %v1771, %v1783
    %v1785 = vpop.f32.mrf.mxu0
    %1786 = vdwg.mxu0
    %1787 = vmatpush.bf16.msra.mxu0 %v1667
    %1788 = vmatpush.bf16.msra.mxu0 %v1666
    %1789 = vmatpush.bf16.msra.mxu0 %v1665
    %1790 = vmatpush.bf16.msra.mxu0 %v1664
    %1791 = vmatpush.bf16.msra.mxu0 %v1663
    %1792 = vmatpush.bf16.msra.mxu0 %v1662
    %1793 = vmatpush.bf16.msra.mxu0 %v1661
    %1794 = vmatpush.bf16.msra.mxu0 %v1660
    %1795 = vmatmul.bf16.gmra.mxu0 %v1321
    %v1796 = vpop.f32.mrf.mxu0
    %v1797 = vadd.f32 %v1784, %v1796
    %v1798 = vpop.f32.mrf.mxu0
    %1799 = vdwg.mxu0
    %1800 = vmatpush.bf16.msra.mxu0 0
    %1801 = vmatpush.bf16.msra.mxu0 0
    %1802 = vmatpush.bf16.msra.mxu0 0
    %1803 = vmatpush.bf16.msra.mxu0 0
    %1804 = vmatpush.bf16.msra.mxu0 0
    %1805 = vmatpush.bf16.msra.mxu0 0
    %1806 = vmatpush.bf16.msra.mxu0 0
    %1807 = vmatpush.bf16.msra.mxu0 %v1668
    %1808 = vmatmul.bf16.gmra.mxu0 %v1720
    %v1809 = vpop.f32.mrf.mxu0
    %v1810 = vadd.f32 %v1797, %v1809
    %v1811 = vpop.f32.mrf.mxu0
    %1812 = vdwg.mxu0
    %v1813 = vsub.f32 0.0, %v1810
    %v1814 = vmul.f32 %v1813, 1.442695
    %v1815 = vpow.pop %v1814
    %v1816 = vadd.f32 %v1815, 1.0
    %v1817 = vrcp.pop %v1816
    %1818 = vst.msk [vmem:[#allocation2] sm:$0xff] %vm1718, %v1817
    // Predicated region
    $region22: #{tpu_custom_call.1} parent=1 // pred_check
      _
    $region23: #{tpu_custom_call.1} parent=1 // pred_check_branch
      %1820 = sbr.rel (0) target = $region25
    $region24: #{tpu_custom_call.1} parent=1 // pred_region
      %1822 = vsyncadd [#allocation3], 0
      %s1824 = sshll.u32 [#allocation2], 4
      %s1825 = int_to_ptr.vmem [resolvable:$true] %s1824
      %s1826 = sshll.u32 %s5, 4
      %s1827 = int_to_ptr.hbm [resolvable:$true] %s1826
      %1829 = dma.vmem_to_hbm [thread:$0]  %s1825, 128, %s1827, [#allocation3]
    $region25: #{tpu_custom_call.1} parent=1 // pred_fallthru
      _
    // Predicated region
    $region26: #{tpu_custom_call.1} parent=1 // pred_check
      _
    $region27: #{tpu_custom_call.1} parent=1 // pred_check_branch
      %1831 = sbr.rel (0) target = $region29
    $region28: #{tpu_custom_call.1} parent=1 // pred_region
      %1833 = dma.done [#allocation3], 128
    $region29: #{tpu_custom_call.1} parent=1 // pred_fallthru
      _
    %1834 = vsyncpa [#allocation3], 1

</llo_original>
